<compile_context>
chip_gen: v7x
topology: tpu7x:2x2x1
jax: 0.10.0
libtpu: 0.0.40
codegen_flags: <defaults>
</compile_context>

<pallas_src>
import functools

import jax
import jax.numpy as jnp
from jax.experimental import pallas as pl
from jax.experimental.pallas import tpu as pltpu


K_PAD = 1024  # 960 input features zero-padded to a 128-lane multiple


# ----------------------------- Pallas kernel --------------------------------


def _actor_critic_kernel(A, x_ref, w1_ref, w2_ref, w3_ref, wh_ref, b_ref, out_ref):
    """Fused actor+critic MLP.  All weights bf16, accumulation f32.

    x_ref : [Bb, 1024] bf16      (batch tile, zero-padded features)
    w1    : [1024, 512] bf16     ([:, :256]=actor L1, [:, 256:]=critic L1)
    w2    : [512, 256]  bf16     block-diag(actor L2, critic L2)
    w3    : [256, 128]  bf16     block-diag(actor L3, critic L3)
    wh    : [128, 128]  bf16     cols 0..A-1 = actor head, col A = critic head
    b     : [4, 512]    f32      packed biases (rows: L1, L2, L3, head)
    out   : [2, Bb, 128] f32     slab 0 = probs (cols<A) + value (col A)
                                 slab 1 = log-probs (cols<A)
    """
    x = x_ref[...]                                   # bf16 [Bb, 1024]
    b = b_ref[...]                                   # f32  [4, 512]

    h = jnp.dot(x, w1_ref[...], preferred_element_type=jnp.float32) + b[0:1, :]
    h = jnp.maximum(h, 0.0).astype(jnp.bfloat16)     # [Bb, 512]

    h = jnp.dot(h, w2_ref[...], preferred_element_type=jnp.float32) + b[1:2, 0:256]
    h = jnp.maximum(h, 0.0).astype(jnp.bfloat16)     # [Bb, 256]

    h = jnp.dot(h, w3_ref[...], preferred_element_type=jnp.float32) + b[2:3, 0:128]
    h = jnp.maximum(h, 0.0).astype(jnp.bfloat16)     # [Bb, 128]

    z = jnp.dot(h, wh_ref[...], preferred_element_type=jnp.float32) + b[3:4, 0:128]
    # z: [Bb, 128]; cols 0..A-1 = actor logits, col A = critic value, rest = 0.

    col = jax.lax.broadcasted_iota(jnp.int32, z.shape, 1)
    is_logit = col < A
    neg = jnp.float32(-1e30)

    zm = jnp.where(is_logit, z, neg)                 # mask non-logit lanes
    m = jnp.max(zm, axis=-1, keepdims=True)
    e = jnp.exp(zm - m)                              # masked lanes -> 0
    s = jnp.sum(e, axis=-1, keepdims=True)
    probs = e / s                                    # cols >= A are 0
    logp = jnp.where(is_logit, (z - m) - jnp.log(s), 0.0)
    pv = jnp.where(col == A, z, probs)               # probs in cols<A, value @ col A

    out_ref[0] = pv
    out_ref[1] = logp


# ------------------------------ wrapper --------------------------------------


@functools.partial(jax.jit, static_argnames=("action_dim",))
def actor_critic_forward(x, packed, *, action_dim):
    """Returns (action_probs [B, A], log_probs [B, A], state_values [B, 1])."""
    B, D = x.shape
    A = action_dim

    x_p = x
    if D < K_PAD:
        x_p = jnp.pad(x, ((0, 0), (0, K_PAD - D)))
    x_p = x_p.astype(jnp.bfloat16)

    block_b = B if B <= 128 else 128
    grid = (pl.cdiv(B, block_b),)

    kernel = functools.partial(_actor_critic_kernel, A)
    out = pl.pallas_call(
        kernel,
        out_shape=jax.ShapeDtypeStruct((2, B, 128), jnp.float32),
        grid=grid,
        in_specs=[
            pl.BlockSpec((block_b, K_PAD), lambda i: (i, 0)),          # x (tiled)
            pl.BlockSpec(packed["w1"].shape, lambda i: (0, 0)),        # weights stay
            pl.BlockSpec(packed["w2"].shape, lambda i: (0, 0)),        #  VMEM-resident
            pl.BlockSpec(packed["w3"].shape, lambda i: (0, 0)),        #  across batch
            pl.BlockSpec(packed["wh"].shape, lambda i: (0, 0)),        #  tiles
            pl.BlockSpec(packed["b"].shape, lambda i: (0, 0)),
        ],
        out_specs=pl.BlockSpec((2, block_b, 128), lambda i: (0, i, 0)),
        compiler_params=pltpu.CompilerParams(
            dimension_semantics=("parallel",),   # megacore batch split on v7x
            vmem_limit_bytes=16 << 20,
        ),
    )(x_p, packed["w1"], packed["w2"], packed["w3"], packed["wh"], packed["b"])

    probs = out[0, :, :A]
    value = out[0, :, A:A + 1]
    logp = out[1, :, :A]
    return probs, logp, value


def evaluate(x, action, packed, *, action_dim):
    """PPO `evaluate`: (action_logprobs, state_values, dist_entropy)."""
    probs, logp, value = actor_critic_forward(x, packed, action_dim=action_dim)
    action_logprobs = jnp.take_along_axis(logp, action[:, None], axis=-1)[:, 0]
    dist_entropy = -jnp.sum(probs * logp, axis=-1)
    return action_logprobs, value, dist_entropy
    # TODO(synk): Categorical.sample() from act() is host/RNG glue, left outside the kernel.


# -------------------------- deterministic params -----------------------------


def _linear_init(key, fan_in, fan_out):
    """Mimics PyTorch nn.Linear default init: U(-1/sqrt(fan_in), 1/sqrt(fan_in))."""
    kw, kb = jax.random.split(key)
    bound = 1.0 / jnp.sqrt(jnp.float32(fan_in))
    w = jax.random.uniform(kw, (fan_in, fan_out), jnp.float32, -bound, bound)
    b = jax.random.uniform(kb, (1, fan_out), jnp.float32, -bound, bound)
    return w, b


def make_params(action_dim, seed=0):
    key = jax.random.PRNGKey(seed)
    keys = jax.random.split(key, 8)
    p = {}
    # actor network (own trunk)
    p["actor_w1"], p["actor_b1"] = _linear_init(keys[0], 960, 256)
    p["actor_w2"], p["actor_b2"] = _linear_init(keys[1], 256, 128)
    p["actor_w3"], p["actor_b3"] = _linear_init(keys[2], 128, 64)
    p["actor_head_w"], p["actor_head_b"] = _linear_init(keys[3], 64, action_dim)
    # critic network (separate trunk)
    p["critic_w1"], p["critic_b1"] = _linear_init(keys[4], 960, 256)
    p["critic_w2"], p["critic_b2"] = _linear_init(keys[5], 256, 128)
    p["critic_w3"], p["critic_b3"] = _linear_init(keys[6], 128, 64)
    p["critic_head_w"], p["critic_head_b"] = _linear_init(keys[7], 64, 1)
    return p


def pack_params(p, action_dim):
    """Fuse actor/critic weights (bf16) and pack all biases (f32) for the kernel."""
    A = action_dim
    assert A + 1 <= 128

    # layer 1: shared input -> concat along output axis, pad K 960 -> 1024
    w1 = jnp.concatenate([p["actor_w1"], p["critic_w1"]], axis=1)       # [960, 512]
    w1 = jnp.pad(w1, ((0, K_PAD - w1.shape[0]), (0, 0)))                # [1024, 512]

    # layers 2/3: block-diagonal fusion
    w2 = jnp.zeros((512, 256), jnp.float32)
    w2 = w2.at[:256, :128].set(p["actor_w2"]).at[256:, 128:].set(p["critic_w2"])
    w3 = jnp.zeros((256, 128), jnp.float32)
    w3 = w3.at[:128, :64].set(p["actor_w3"]).at[128:, 64:].set(p["critic_w3"])

    # heads: cols 0..A-1 = actor logits, col A = critic value (lane-dense N=128)
    wh = jnp.zeros((128, 128), jnp.float32)
    wh = wh.at[:64, :A].set(p["actor_head_w"]).at[64:, A:A + 1].set(p["critic_head_w"])

    b = jnp.zeros((4, 512), jnp.float32)
    b = b.at[0, :512].set(jnp.concatenate([p["actor_b1"][0], p["critic_b1"][0]]))
    b = b.at[1, :256].set(jnp.concatenate([p["actor_b2"][0], p["critic_b2"][0]]))
    b = b.at[2, :128].set(jnp.concatenate([p["actor_b3"][0], p["critic_b3"][0]]))
    b = b.at[3, :A].set(p["actor_head_b"][0])
    b = b.at[3, A].set(p["critic_head_b"][0, 0])

    return {
        "w1": w1.astype(jnp.bfloat16),
        "w2": w2.astype(jnp.bfloat16),
        "w3": w3.astype(jnp.bfloat16),
        "wh": wh.astype(jnp.bfloat16),
        "b": b,                                                          # f32
    }


# ------------------------------ references -----------------------------------


def _reference_packed(x, packed, A):
    """Plain-JAX reference at matching (bf16-weight) precision."""
    xp = jnp.pad(x, ((0, 0), (0, K_PAD - x.shape[1]))).astype(jnp.bfloat16)
    b = packed["b"]
    h = jnp.dot(xp, packed["w1"], preferred_element_type=jnp.float32) + b[0:1, :]
    h = jnp.maximum(h, 0.0).astype(jnp.bfloat16)
    h = jnp.dot(h, packed["w2"], preferred_element_type=jnp.float32) + b[1:2, :256]
    h = jnp.maximum(h, 0.0).astype(jnp.bfloat16)
    h = jnp.dot(h, packed["w3"], preferred_element_type=jnp.float32) + b[2:3, :128]
    h = jnp.maximum(h, 0.0).astype(jnp.bfloat16)
    z = jnp.dot(h, packed["wh"], preferred_element_type=jnp.float32) + b[3:4, :128]
    logits = z[:, :A]
    value = z[:, A:A + 1]
    return jax.nn.softmax(logits, axis=-1), jax.nn.log_softmax(logits, axis=-1), value


def _reference_f32(x, p):
    """Original (unfused, f32-weight) module semantics."""
    def trunk(h, w1, b1, w2, b2, w3, b3):
        h = jnp.maximum(h @ w1 + b1, 0.0)
        h = jnp.maximum(h @ w2 + b2, 0.0)
        h = jnp.maximum(h @ w3 + b3, 0.0)
        return h

    ah = trunk(x, p["actor_w1"], p["actor_b1"], p["actor_w2"], p["actor_b2"],
               p["actor_w3"], p["actor_b3"])
    probs = jax.nn.softmax(ah @ p["actor_head_w"] + p["actor_head_b"], axis=-1)
    ch = trunk(x, p["critic_w1"], p["critic_b1"], p["critic_w2"], p["critic_b2"],
               p["critic_w3"], p["critic_b3"])
    value = ch @ p["critic_head_w"] + p["critic_head_b"]
    return probs, value


# --------------------------------- main ---------------------------------------


if __name__ == "__main__":
    B = 8            # small batch
    STATE_DIM = 960  # flat image features expected by the module's "cnn"
    ACTION_DIM = 4

    key = jax.random.PRNGKey(0)
    kx, ka = jax.random.split(key)
    x = jax.random.normal(kx, (B, STATE_DIM), jnp.float32)
    actions = jax.random.randint(ka, (B,), 0, ACTION_DIM)

    raw = make_params(ACTION_DIM, seed=0)
    packed = pack_params(raw, ACTION_DIM)

    probs, logp, value = actor_critic_forward(x, packed, action_dim=ACTION_DIM)
    jax.block_until_ready((probs, logp, value))

    # tight check vs matching-precision (bf16 weights, f32 accumulation) reference
    rp, rl, rv = _reference_packed(x, packed, ACTION_DIM)
    assert jnp.allclose(probs, rp, atol=2e-3, rtol=2e-3)
    assert jnp.allclose(logp, rl, atol=2e-3, rtol=2e-3)
    assert jnp.allclose(value, rv, atol=2e-3, rtol=2e-3)

    # semantic check vs the original f32 module (loose: bf16 weight quantization)
    fp, fv = _reference_f32(x, raw)
    assert jnp.allclose(probs, fp, atol=5e-2, rtol=5e-2)
    assert jnp.allclose(value, fv, atol=5e-2, rtol=5e-2)
    assert jnp.allclose(jnp.sum(probs, axis=-1), 1.0, atol=1e-5)

    # PPO evaluate() glue on top of kernel outputs (log-probs from in-kernel LSE)
    lp, vals, ent = evaluate(x, actions, packed, action_dim=ACTION_DIM)
    jax.block_until_ready((lp, vals, ent))
    assert bool(jnp.all(jnp.isfinite(lp))) and bool(jnp.all(jnp.isfinite(ent)))

    print("KERNEL_OK")
</pallas_src>

<mosaic_0001>
module attributes {stable_mosaic.version = 11 : i64} {
  func.func @_actor_critic_kernel(%arg0: i32, %arg1: memref<8x1024xbf16, #tpu.memory_space<vmem>>, %arg2: memref<1024x512xbf16, #tpu.memory_space<vmem>>, %arg3: memref<512x256xbf16, #tpu.memory_space<vmem>>, %arg4: memref<256x128xbf16, #tpu.memory_space<vmem>>, %arg5: memref<128x128xbf16, #tpu.memory_space<vmem>>, %arg6: memref<4x512xf32, #tpu.memory_space<vmem>>, %arg7: memref<2x8x128xf32, #tpu.memory_space<vmem>>) attributes {dimension_semantics = [#tpu.dimension_semantics<parallel>], iteration_bounds = array<i64: 1>, scalar_prefetch = 0 : i64, scratch_operands = 0 : i64, tpu.core_type = #tpu.core_type<tc>, window_params = [{transform_indices = @transform_0, window_bounds = array<i64: 8, 1024>}, {pipeline_mode = #tpu.pipeline_mode<synchronous>, transform_indices = @transform_1, window_bounds = array<i64: 1024, 512>}, {pipeline_mode = #tpu.pipeline_mode<synchronous>, transform_indices = @transform_2, window_bounds = array<i64: 512, 256>}, {pipeline_mode = #tpu.pipeline_mode<synchronous>, transform_indices = @transform_3, window_bounds = array<i64: 256, 128>}, {pipeline_mode = #tpu.pipeline_mode<synchronous>, transform_indices = @transform_4, window_bounds = array<i64: 128, 128>}, {pipeline_mode = #tpu.pipeline_mode<synchronous>, transform_indices = @transform_5, window_bounds = array<i64: 4, 512>}, {transform_indices = @transform_6, window_bounds = array<i64: 2, 8, 128>}]} {
    %c0 = arith.constant 0 : index
    %c0_0 = arith.constant 0 : index
    %0 = vector.load %arg1[%c0, %c0_0] : memref<8x1024xbf16, #tpu.memory_space<vmem>>, vector<8x1024xbf16>
    %c0_1 = arith.constant 0 : index
    %c0_2 = arith.constant 0 : index
    %1 = vector.load %arg6[%c0_1, %c0_2] : memref<4x512xf32, #tpu.memory_space<vmem>>, vector<4x512xf32>
    %c0_3 = arith.constant 0 : index
    %c0_4 = arith.constant 0 : index
    %2 = vector.load %arg2[%c0_3, %c0_4] : memref<1024x512xbf16, #tpu.memory_space<vmem>>, vector<1024x512xbf16>
    %cst = arith.constant dense<0.000000e+00> : vector<8x512xf32>
    %3 = tpu.matmul %0, %2, %cst {dimension_numbers = #tpu.dot_dimension_numbers<[1], [0], [0], [1], [0, 0, 1, 1], [], []>} : vector<8x1024xbf16>, vector<1024x512xbf16>, vector<8x512xf32> -> vector<8x512xf32>
    %4 = vector.extract_strided_slice %1 {offsets = [0, 0], sizes = [1, 512], strides = [1, 1]} : vector<4x512xf32> to vector<1x512xf32>
    %5 = vector.broadcast %4 : vector<1x512xf32> to vector<8x512xf32>
    %6 = arith.addf %3, %5 : vector<8x512xf32>
    %cst_5 = arith.constant 0.000000e+00 : f32
    %7 = vector.broadcast %cst_5 : f32 to vector<8x512xf32>
    %8 = arith.maximumf %6, %7 : vector<8x512xf32>
    %9 = arith.truncf %8 : vector<8x512xf32> to vector<8x512xbf16>
    %c0_6 = arith.constant 0 : index
    %c0_7 = arith.constant 0 : index
    %10 = vector.load %arg3[%c0_6, %c0_7] : memref<512x256xbf16, #tpu.memory_space<vmem>>, vector<512x256xbf16>
    %cst_8 = arith.constant dense<0.000000e+00> : vector<8x256xf32>
    %11 = tpu.matmul %9, %10, %cst_8 {dimension_numbers = #tpu.dot_dimension_numbers<[1], [0], [0], [1], [0, 0, 1, 1], [], []>} : vector<8x512xbf16>, vector<512x256xbf16>, vector<8x256xf32> -> vector<8x256xf32>
    %12 = vector.extract_strided_slice %1 {offsets = [1, 0], sizes = [1, 256], strides = [1, 1]} : vector<4x512xf32> to vector<1x256xf32>
    %13 = vector.broadcast %12 : vector<1x256xf32> to vector<8x256xf32>
    %14 = arith.addf %11, %13 : vector<8x256xf32>
    %cst_9 = arith.constant 0.000000e+00 : f32
    %15 = vector.broadcast %cst_9 : f32 to vector<8x256xf32>
    %16 = arith.maximumf %14, %15 : vector<8x256xf32>
    %17 = arith.truncf %16 : vector<8x256xf32> to vector<8x256xbf16>
    %c0_10 = arith.constant 0 : index
    %c0_11 = arith.constant 0 : index
    %18 = vector.load %arg4[%c0_10, %c0_11] : memref<256x128xbf16, #tpu.memory_space<vmem>>, vector<256x128xbf16>
    %cst_12 = arith.constant dense<0.000000e+00> : vector<8x128xf32>
    %19 = tpu.matmul %17, %18, %cst_12 {dimension_numbers = #tpu.dot_dimension_numbers<[1], [0], [0], [1], [0, 0, 1, 1], [], []>} : vector<8x256xbf16>, vector<256x128xbf16>, vector<8x128xf32> -> vector<8x128xf32>
    %20 = vector.extract_strided_slice %1 {offsets = [2, 0], sizes = [1, 128], strides = [1, 1]} : vector<4x512xf32> to vector<1x128xf32>
    %21 = vector.broadcast %20 : vector<1x128xf32> to vector<8x128xf32>
    %22 = arith.addf %19, %21 : vector<8x128xf32>
    %cst_13 = arith.constant 0.000000e+00 : f32
    %23 = vector.broadcast %cst_13 : f32 to vector<8x128xf32>
    %24 = arith.maximumf %22, %23 : vector<8x128xf32>
    %25 = arith.truncf %24 : vector<8x128xf32> to vector<8x128xbf16>
    %c0_14 = arith.constant 0 : index
    %c0_15 = arith.constant 0 : index
    %26 = vector.load %arg5[%c0_14, %c0_15] : memref<128x128xbf16, #tpu.memory_space<vmem>>, vector<128x128xbf16>
    %cst_16 = arith.constant dense<0.000000e+00> : vector<8x128xf32>
    %27 = tpu.matmul %25, %26, %cst_16 {dimension_numbers = #tpu.dot_dimension_numbers<[1], [0], [0], [1], [0, 0, 1, 1], [], []>} : vector<8x128xbf16>, vector<128x128xbf16>, vector<8x128xf32> -> vector<8x128xf32>
    %28 = vector.extract_strided_slice %1 {offsets = [3, 0], sizes = [1, 128], strides = [1, 1]} : vector<4x512xf32> to vector<1x128xf32>
    %29 = vector.broadcast %28 : vector<1x128xf32> to vector<8x128xf32>
    %30 = arith.addf %27, %29 : vector<8x128xf32>
    %31 = tpu.iota {dimensions = array<i32: 1>} : vector<8x128xi32>
    %c4_i32 = arith.constant 4 : i32
    %32 = vector.broadcast %c4_i32 : i32 to vector<8x128xi32>
    %33 = arith.cmpi slt, %31, %32 : vector<8x128xi32>
    %cst_17 = arith.constant -1.000000e+30 : f32
    %34 = vector.broadcast %cst_17 : f32 to vector<8x128xf32>
    %35 = arith.select %33, %30, %34 : vector<8x128xi1>, vector<8x128xf32>
    %cst_18 = arith.constant dense<0xFF800000> : vector<8xf32>
    %36 = vector.multi_reduction <maximumf>, %35, %cst_18 [1] : vector<8x128xf32> to vector<8xf32>
    %37 = vector.shape_cast %36 : vector<8xf32> to vector<8x1xf32>
    %38 = vector.broadcast %37 : vector<8x1xf32> to vector<8x128xf32>
    %39 = arith.subf %35, %38 : vector<8x128xf32>
    %40 = math.exp %39 : vector<8x128xf32>
    %cst_19 = arith.constant dense<0.000000e+00> : vector<8xf32>
    %41 = vector.multi_reduction <add>, %40, %cst_19 [1] : vector<8x128xf32> to vector<8xf32>
    %42 = vector.shape_cast %41 : vector<8xf32> to vector<8x1xf32>
    %43 = vector.broadcast %42 : vector<8x1xf32> to vector<8x128xf32>
    %44 = arith.divf %40, %43 : vector<8x128xf32>
    %45 = vector.broadcast %37 : vector<8x1xf32> to vector<8x128xf32>
    %46 = arith.subf %30, %45 : vector<8x128xf32>
    %47 = math.log %42 : vector<8x1xf32>
    %48 = vector.broadcast %47 : vector<8x1xf32> to vector<8x128xf32>
    %49 = arith.subf %46, %48 : vector<8x128xf32>
    %cst_20 = arith.constant 0.000000e+00 : f32
    %50 = vector.broadcast %cst_20 : f32 to vector<8x128xf32>
    %51 = arith.select %33, %49, %50 : vector<8x128xi1>, vector<8x128xf32>
    %c4_i32_21 = arith.constant 4 : i32
    %52 = vector.broadcast %c4_i32_21 : i32 to vector<8x128xi32>
    %53 = arith.cmpi eq, %31, %52 : vector<8x128xi32>
    %54 = arith.select %53, %30, %44 : vector<8x128xi1>, vector<8x128xf32>
    %c0_22 = arith.constant 0 : index
    %c0_23 = arith.constant 0 : index
    %c0_24 = arith.constant 0 : index
    %55 = vector.load %arg7[%c0_22, %c0_23, %c0_24] : memref<2x8x128xf32, #tpu.memory_space<vmem>>, vector<1x8x128xf32>
    %56 = vector.shape_cast %55 : vector<1x8x128xf32> to vector<8x128xf32>
    %57 = vector.shape_cast %54 : vector<8x128xf32> to vector<1x8x128xf32>
    tpu.vector_store %arg7[%c0_22, %c0_23, %c0_24], %57 {strides = array<i32>} : memref<2x8x128xf32, #tpu.memory_space<vmem>>, vector<1x8x128xf32>,
    %c1 = arith.constant 1 : index
    %c0_25 = arith.constant 0 : index
    %c0_26 = arith.constant 0 : index
    %58 = vector.load %arg7[%c1, %c0_25, %c0_26] : memref<2x8x128xf32, #tpu.memory_space<vmem>>, vector<1x8x128xf32>
    %59 = vector.shape_cast %58 : vector<1x8x128xf32> to vector<8x128xf32>
    %60 = vector.shape_cast %51 : vector<8x128xf32> to vector<1x8x128xf32>
    tpu.vector_store %arg7[%c1, %c0_25, %c0_26], %60 {strides = array<i32>} : memref<2x8x128xf32, #tpu.memory_space<vmem>>, vector<1x8x128xf32>,
    return
  }
  func.func @transform_0(%arg0: i32) -> (i32, i32) {
    %c0_i32 = arith.constant 0 : i32
    %c0_i32_0 = arith.constant 0 : i32
    return %arg0, %c0_i32 : i32, i32
  }
  func.func @transform_1(%arg0: i32) -> (i32, i32) {
    %c0_i32 = arith.constant 0 : i32
    %c0_i32_0 = arith.constant 0 : i32
    %c0_i32_1 = arith.constant 0 : i32
    return %c0_i32, %c0_i32_0 : i32, i32
  }
  func.func @transform_2(%arg0: i32) -> (i32, i32) {
    %c0_i32 = arith.constant 0 : i32
    %c0_i32_0 = arith.constant 0 : i32
    %c0_i32_1 = arith.constant 0 : i32
    return %c0_i32, %c0_i32_0 : i32, i32
  }
  func.func @transform_3(%arg0: i32) -> (i32, i32) {
    %c0_i32 = arith.constant 0 : i32
    %c0_i32_0 = arith.constant 0 : i32
    %c0_i32_1 = arith.constant 0 : i32
    return %c0_i32, %c0_i32_0 : i32, i32
  }
  func.func @transform_4(%arg0: i32) -> (i32, i32) {
    %c0_i32 = arith.constant 0 : i32
    %c0_i32_0 = arith.constant 0 : i32
    %c0_i32_1 = arith.constant 0 : i32
    return %c0_i32, %c0_i32_0 : i32, i32
  }
  func.func @transform_5(%arg0: i32) -> (i32, i32) {
    %c0_i32 = arith.constant 0 : i32
    %c0_i32_0 = arith.constant 0 : i32
    %c0_i32_1 = arith.constant 0 : i32
    return %c0_i32, %c0_i32_0 : i32, i32
  }
  func.func @transform_6(%arg0: i32) -> (i32, i32, i32) {
    %c0_i32 = arith.constant 0 : i32
    %c0_i32_0 = arith.constant 0 : i32
    %c0_i32_1 = arith.constant 0 : i32
    return %c0_i32, %arg0, %c0_i32_0 : i32, i32, i32
  }
}

</mosaic_0001>

<llo_original>
// kernel: actor_critic_forward.1
$region0: #{actor_critic_forward.1}
  #allocation0 [shape = 'u32[]', space=smem, size = 0x4, offset = 0x4, fixed_abs, tag = 'smem constant byte address 0x4 - core index']
  #allocation1 [shape = 'u32[144,128]{1,0:T(1,128)}', space=vmem, size = 0x12000, scoped, tag = 'internal scratch']
  %s0 = inlined_call_operand.vmem [shape: bf16[8,1024], index: 0, kind: input, shape index: {}]
  %s1 = inlined_call_operand.hbm [shape: bf16[1024,512], index: 1, kind: input, shape index: {}]
  %s2 = inlined_call_operand.hbm [shape: bf16[512,256], index: 2, kind: input, shape index: {}]
  %s3 = inlined_call_operand.vmem [shape: bf16[256,128], index: 3, kind: input, shape index: {}]
  %s4 = inlined_call_operand.hbm [shape: bf16[128,128], index: 4, kind: input, shape index: {}]
  %s5 = inlined_call_operand.vmem [shape: f32[4,512], index: 5, kind: input, shape index: {}]
  %s6 = inlined_call_operand.vmem [shape: f32[2,8,128], index: 6, kind: output, shape index: {}]
  %s7 = sld [smem:[#allocation0]]
  $region46: #{actor_critic_forward.1} parent=0
    _
  %s9 = ssub.s32 1, %s7
  %s10 = scalar_select 0, %s9, %s7
  $region1: #{actor_critic_forward.1} parent=0
    #allocation2 [shape = 'u8[1048576]{0}', space=vmem, size = 0x100000, scoped, tag = 'input window, operand 1, single buffered']
    #allocation3 [shape = 's32[1]{0}', space=sflag, size = 0x4, scoped, tag = 'scoped memory for actor_critic_forward.1']
    #allocation4 [shape = 'u8[262144]{0}', space=vmem, size = 0x40000, scoped, tag = 'input window, operand 2, single buffered']
    #allocation5 [shape = 's32[1]{0}', space=sflag, size = 0x4, scoped, tag = 'scoped memory for actor_critic_forward.1']
    #allocation6 [shape = 'u8[32768]{0}', space=vmem, size = 0x8000, scoped, tag = 'input window, operand 4, single buffered']
    %11 = vsyncpa [#allocation3], 0
    %12 = vsyncpa [#allocation5], 0
    // Predicated region
    $region2: #{actor_critic_forward.1} parent=1 // pred_check
      _
    $region3: #{actor_critic_forward.1} parent=1 // pred_check_branch
      %14 = sbr.rel (0) target = $region5
    $region4: #{actor_critic_forward.1} parent=1 // pred_region
      _
    $region5: #{actor_critic_forward.1} parent=1 // pred_fallthru
      _
    // Predicated region
    $region6: #{actor_critic_forward.1} parent=1 // pred_check
      _
    $region7: #{actor_critic_forward.1} parent=1 // pred_check_branch
      %16 = sbr.rel (0) target = $region9
    $region8: #{actor_critic_forward.1} parent=1 // pred_region
      %s18 = ssub.s32 32768, 32768
      %19 = vsyncadd [#allocation3], %s18
      %s20 = sshll.u32 [#allocation2], 4
      %s21 = int_to_ptr.vmem [resolvable:$true] %s20
      %26 = dma.hbm_to_vmem [thread:$0]  %s1, 32768, %s21, [#allocation3], 256, 256, 16
    $region9: #{actor_critic_forward.1} parent=1 // pred_fallthru
      _
    // Predicated region
    $region10: #{actor_critic_forward.1} parent=1 // pred_check
      _
    $region11: #{actor_critic_forward.1} parent=1 // pred_check_branch
      %28 = sbr.rel (0) target = $region13
    $region12: #{actor_critic_forward.1} parent=1 // pred_region
      %s30 = ssub.s32 8192, 8192
      %31 = vsyncadd [#allocation5], %s30
      %s32 = sshll.u32 [#allocation4], 4
      %s33 = int_to_ptr.vmem [resolvable:$true] %s32
      %38 = dma.hbm_to_vmem [thread:$0]  %s2, 8192, %s33, [#allocation5], 128, 128, 8
    $region13: #{actor_critic_forward.1} parent=1 // pred_fallthru
      _
    // Predicated region
    $region14: #{actor_critic_forward.1} parent=1 // pred_check
      _
    $region15: #{actor_critic_forward.1} parent=1 // pred_check_branch
      %40 = sbr.rel (0) target = $region17
    $region16: #{actor_critic_forward.1} parent=1 // pred_region
      _
    $region17: #{actor_critic_forward.1} parent=1 // pred_fallthru
      _
    // Predicated region
    $region18: #{actor_critic_forward.1} parent=1 // pred_check
      _
    $region19: #{actor_critic_forward.1} parent=1 // pred_check_branch
      %42 = sbr.rel (0) target = $region21
    $region20: #{actor_critic_forward.1} parent=1 // pred_region
      %s44 = ssub.s32 1024, 1024
      %45 = vsyncadd [#allocation5], %s44
      %s46 = sshll.u32 [#allocation6], 4
      %s47 = int_to_ptr.vmem [resolvable:$true] %s46
      %52 = dma.hbm_to_vmem [thread:$0]  %s4, 1024, %s47, [#allocation5], 64, 64, 4
    $region21: #{actor_critic_forward.1} parent=1 // pred_fallthru
      _
    // Predicated region
    $region22: #{actor_critic_forward.1} parent=1 // pred_check
      _
    $region23: #{actor_critic_forward.1} parent=1 // pred_check_branch
      %54 = sbr.rel (0) target = $region25
    $region24: #{actor_critic_forward.1} parent=1 // pred_region
      _
    $region25: #{actor_critic_forward.1} parent=1 // pred_fallthru
      _
    // Predicated region
    $region26: #{actor_critic_forward.1} parent=1 // pred_check
      _
    $region27: #{actor_critic_forward.1} parent=1 // pred_check_branch
      %56 = sbr.rel (0) target = $region29
    $region28: #{actor_critic_forward.1} parent=1 // pred_region
      %57 = dma.done [#allocation3], 32768
    $region29: #{actor_critic_forward.1} parent=1 // pred_fallthru
      _
    // Predicated region
    $region30: #{actor_critic_forward.1} parent=1 // pred_check
      _
    $region31: #{actor_critic_forward.1} parent=1 // pred_check_branch
      %59 = sbr.rel (0) target = $region33
    $region32: #{actor_critic_forward.1} parent=1 // pred_region
      %60 = dma.done [#allocation5], 8192
    $region33: #{actor_critic_forward.1} parent=1 // pred_fallthru
      _
    // Predicated region
    $region34: #{actor_critic_forward.1} parent=1 // pred_check
      _
    $region35: #{actor_critic_forward.1} parent=1 // pred_check_branch
      %62 = sbr.rel (0) target = $region37
    $region36: #{actor_critic_forward.1} parent=1 // pred_region
      %63 = dma.done [#allocation5], 1024
    $region37: #{actor_critic_forward.1} parent=1 // pred_fallthru
      _
    %v65 = vld [vmem:[%s0] sm:$0xff]
    %v66 = vld [vmem:[%s0 + $0x8] sm:$0xff]
    %v67 = vld [vmem:[%s0 + $0x10] sm:$0xff]
    %v68 = vld [vmem:[%s0 + $0x18] sm:$0xff]
    %v69 = vld [vmem:[%s5] sm:$0xff]
    %v70 = vld [vmem:[%s5 + $0x8] sm:$0xff]
    %v71 = vld [vmem:[#allocation2] sm:$0xff]
    %v72 = vld [vmem:[#allocation2 + $0x8] sm:$0xff]
    %v73 = vld [vmem:[#allocation2 + $0x10] sm:$0xff]
    %v74 = vld [vmem:[#allocation2 + $0x18] sm:$0xff]
    %v75 = vld [vmem:[#allocation2 + $0x20] sm:$0xff]
    %v76 = vld [vmem:[#allocation2 + $0x28] sm:$0xff]
    %v77 = vld [vmem:[#allocation2 + $0x30] sm:$0xff]
    %v78 = vld [vmem:[#allocation2 + $0x38] sm:$0xff]
    %v79 = vld [vmem:[#allocation2 + $0x40] sm:$0xff]
    %v80 = vld [vmem:[#allocation2 + $0x48] sm:$0xff]
    %v81 = vld [vmem:[#allocation2 + $0x50] sm:$0xff]
    %v82 = vld [vmem:[#allocation2 + $0x58] sm:$0xff]
    %v83 = vld [vmem:[#allocation2 + $0x60] sm:$0xff]
    %v84 = vld [vmem:[#allocation2 + $0x68] sm:$0xff]
    %v85 = vld [vmem:[#allocation2 + $0x70] sm:$0xff]
    %v86 = vld [vmem:[#allocation2 + $0x78] sm:$0xff]
    %v87 = vld [vmem:[#allocation2 + $0x80] sm:$0xff]
    %v88 = vld [vmem:[#allocation2 + $0x88] sm:$0xff]
    %v89 = vld [vmem:[#allocation2 + $0x90] sm:$0xff]
    %v90 = vld [vmem:[#allocation2 + $0x98] sm:$0xff]
    %v91 = vld [vmem:[#allocation2 + $0xa0] sm:$0xff]
    %v92 = vld [vmem:[#allocation2 + $0xa8] sm:$0xff]
    %v93 = vld [vmem:[#allocation2 + $0xb0] sm:$0xff]
    %v94 = vld [vmem:[#allocation2 + $0xb8] sm:$0xff]
    %v95 = vld [vmem:[#allocation2 + $0xc0] sm:$0xff]
    %v96 = vld [vmem:[#allocation2 + $0xc8] sm:$0xff]
    %v97 = vld [vmem:[#allocation2 + $0xd0] sm:$0xff]
    %v98 = vld [vmem:[#allocation2 + $0xd8] sm:$0xff]
    %v99 = vld [vmem:[#allocation2 + $0xe0] sm:$0xff]
    %v100 = vld [vmem:[#allocation2 + $0xe8] sm:$0xff]
    %v101 = vld [vmem:[#allocation2 + $0xf0] sm:$0xff]
    %v102 = vld [vmem:[#allocation2 + $0xf8] sm:$0xff]
    %v103 = vld [vmem:[#allocation2 + $0x100] sm:$0xff]
    %v104 = vld [vmem:[#allocation2 + $0x108] sm:$0xff]
    %v105 = vld [vmem:[#allocation2 + $0x110] sm:$0xff]
    %v106 = vld [vmem:[#allocation2 + $0x118] sm:$0xff]
    %v107 = vld [vmem:[#allocation2 + $0x120] sm:$0xff]
    %v108 = vld [vmem:[#allocation2 + $0x128] sm:$0xff]
    %v109 = vld [vmem:[#allocation2 + $0x130] sm:$0xff]
    %v110 = vld [vmem:[#allocation2 + $0x138] sm:$0xff]
    %v111 = vld [vmem:[#allocation2 + $0x140] sm:$0xff]
    %v112 = vld [vmem:[#allocation2 + $0x148] sm:$0xff]
    %v113 = vld [vmem:[#allocation2 + $0x150] sm:$0xff]
    %v114 = vld [vmem:[#allocation2 + $0x158] sm:$0xff]
    %v115 = vld [vmem:[#allocation2 + $0x160] sm:$0xff]
    %v116 = vld [vmem:[#allocation2 + $0x168] sm:$0xff]
    %v117 = vld [vmem:[#allocation2 + $0x170] sm:$0xff]
    %v118 = vld [vmem:[#allocation2 + $0x178] sm:$0xff]
    %v119 = vld [vmem:[#allocation2 + $0x180] sm:$0xff]
    %v120 = vld [vmem:[#allocation2 + $0x188] sm:$0xff]
    %v121 = vld [vmem:[#allocation2 + $0x190] sm:$0xff]
    %v122 = vld [vmem:[#allocation2 + $0x198] sm:$0xff]
    %v123 = vld [vmem:[#allocation2 + $0x1a0] sm:$0xff]
    %v124 = vld [vmem:[#allocation2 + $0x1a8] sm:$0xff]
    %v125 = vld [vmem:[#allocation2 + $0x1b0] sm:$0xff]
    %v126 = vld [vmem:[#allocation2 + $0x1b8] sm:$0xff]
    %v127 = vld [vmem:[#allocation2 + $0x1c0] sm:$0xff]
    %v128 = vld [vmem:[#allocation2 + $0x1c8] sm:$0xff]
    %v129 = vld [vmem:[#allocation2 + $0x1d0] sm:$0xff]
    %v130 = vld [vmem:[#allocation2 + $0x1d8] sm:$0xff]
    %v131 = vld [vmem:[#allocation2 + $0x1e0] sm:$0xff]
    %v132 = vld [vmem:[#allocation2 + $0x1e8] sm:$0xff]
    %v133 = vld [vmem:[#allocation2 + $0x1f0] sm:$0xff]
    %v134 = vld [vmem:[#allocation2 + $0x1f8] sm:$0xff]
    %v135 = vld [vmem:[#allocation2 + $0x200] sm:$0xff]
    %v136 = vld [vmem:[#allocation2 + $0x208] sm:$0xff]
    %v137 = vld [vmem:[#allocation2 + $0x210] sm:$0xff]
    %v138 = vld [vmem:[#allocation2 + $0x218] sm:$0xff]
    %v139 = vld [vmem:[#allocation2 + $0x220] sm:$0xff]
    %v140 = vld [vmem:[#allocation2 + $0x228] sm:$0xff]
    %v141 = vld [vmem:[#allocation2 + $0x230] sm:$0xff]
    %v142 = vld [vmem:[#allocation2 + $0x238] sm:$0xff]
    %v143 = vld [vmem:[#allocation2 + $0x240] sm:$0xff]
    %v144 = vld [vmem:[#allocation2 + $0x248] sm:$0xff]
    %v145 = vld [vmem:[#allocation2 + $0x250] sm:$0xff]
    %v146 = vld [vmem:[#allocation2 + $0x258] sm:$0xff]
    %v147 = vld [vmem:[#allocation2 + $0x260] sm:$0xff]
    %v148 = vld [vmem:[#allocation2 + $0x268] sm:$0xff]
    %v149 = vld [vmem:[#allocation2 + $0x270] sm:$0xff]
    %v150 = vld [vmem:[#allocation2 + $0x278] sm:$0xff]
    %v151 = vld [vmem:[#allocation2 + $0x280] sm:$0xff]
    %v152 = vld [vmem:[#allocation2 + $0x288] sm:$0xff]
    %v153 = vld [vmem:[#allocation2 + $0x290] sm:$0xff]
    %v154 = vld [vmem:[#allocation2 + $0x298] sm:$0xff]
    %v155 = vld [vmem:[#allocation2 + $0x2a0] sm:$0xff]
    %v156 = vld [vmem:[#allocation2 + $0x2a8] sm:$0xff]
    %v157 = vld [vmem:[#allocation2 + $0x2b0] sm:$0xff]
    %v158 = vld [vmem:[#allocation2 + $0x2b8] sm:$0xff]
    %v159 = vld [vmem:[#allocation2 + $0x2c0] sm:$0xff]
    %v160 = vld [vmem:[#allocation2 + $0x2c8] sm:$0xff]
    %v161 = vld [vmem:[#allocation2 + $0x2d0] sm:$0xff]
    %v162 = vld [vmem:[#allocation2 + $0x2d8] sm:$0xff]
    %v163 = vld [vmem:[#allocation2 + $0x2e0] sm:$0xff]
    %v164 = vld [vmem:[#allocation2 + $0x2e8] sm:$0xff]
    %v165 = vld [vmem:[#allocation2 + $0x2f0] sm:$0xff]
    %v166 = vld [vmem:[#allocation2 + $0x2f8] sm:$0xff]
    %v167 = vld [vmem:[#allocation2 + $0x300] sm:$0xff]
    %v168 = vld [vmem:[#allocation2 + $0x308] sm:$0xff]
    %v169 = vld [vmem:[#allocation2 + $0x310] sm:$0xff]
    %v170 = vld [vmem:[#allocation2 + $0x318] sm:$0xff]
    %v171 = vld [vmem:[#allocation2 + $0x320] sm:$0xff]
    %v172 = vld [vmem:[#allocation2 + $0x328] sm:$0xff]
    %v173 = vld [vmem:[#allocation2 + $0x330] sm:$0xff]
    %v174 = vld [vmem:[#allocation2 + $0x338] sm:$0xff]
    %v175 = vld [vmem:[#allocation2 + $0x340] sm:$0xff]
    %v176 = vld [vmem:[#allocation2 + $0x348] sm:$0xff]
    %v177 = vld [vmem:[#allocation2 + $0x350] sm:$0xff]
    %v178 = vld [vmem:[#allocation2 + $0x358] sm:$0xff]
    %v179 = vld [vmem:[#allocation2 + $0x360] sm:$0xff]
    %v180 = vld [vmem:[#allocation2 + $0x368] sm:$0xff]
    %v181 = vld [vmem:[#allocation2 + $0x370] sm:$0xff]
    %v182 = vld [vmem:[#allocation2 + $0x378] sm:$0xff]
    %v183 = vld [vmem:[#allocation2 + $0x380] sm:$0xff]
    %v184 = vld [vmem:[#allocation2 + $0x388] sm:$0xff]
    %v185 = vld [vmem:[#allocation2 + $0x390] sm:$0xff]
    %v186 = vld [vmem:[#allocation2 + $0x398] sm:$0xff]
    %v187 = vld [vmem:[#allocation2 + $0x3a0] sm:$0xff]
    %v188 = vld [vmem:[#allocation2 + $0x3a8] sm:$0xff]
    %v189 = vld [vmem:[#allocation2 + $0x3b0] sm:$0xff]
    %v190 = vld [vmem:[#allocation2 + $0x3b8] sm:$0xff]
    %v191 = vld [vmem:[#allocation2 + $0x3c0] sm:$0xff]
    %v192 = vld [vmem:[#allocation2 + $0x3c8] sm:$0xff]
    %v193 = vld [vmem:[#allocation2 + $0x3d0] sm:$0xff]
    %v194 = vld [vmem:[#allocation2 + $0x3d8] sm:$0xff]
    %v195 = vld [vmem:[#allocation2 + $0x3e0] sm:$0xff]
    %v196 = vld [vmem:[#allocation2 + $0x3e8] sm:$0xff]
    %v197 = vld [vmem:[#allocation2 + $0x3f0] sm:$0xff]
    %v198 = vld [vmem:[#allocation2 + $0x3f8] sm:$0xff]
    %v199 = vld [vmem:[#allocation2 + $0x400] sm:$0xff]
    %v200 = vld [vmem:[#allocation2 + $0x408] sm:$0xff]
    %v201 = vld [vmem:[#allocation2 + $0x410] sm:$0xff]
    %v202 = vld [vmem:[#allocation2 + $0x418] sm:$0xff]
    %v203 = vld [vmem:[#allocation2 + $0x420] sm:$0xff]
    %v204 = vld [vmem:[#allocation2 + $0x428] sm:$0xff]
    %v205 = vld [vmem:[#allocation2 + $0x430] sm:$0xff]
    %v206 = vld [vmem:[#allocation2 + $0x438] sm:$0xff]
    %v207 = vld [vmem:[#allocation2 + $0x440] sm:$0xff]
    %v208 = vld [vmem:[#allocation2 + $0x448] sm:$0xff]
    %v209 = vld [vmem:[#allocation2 + $0x450] sm:$0xff]
    %v210 = vld [vmem:[#allocation2 + $0x458] sm:$0xff]
    %v211 = vld [vmem:[#allocation2 + $0x460] sm:$0xff]
    %v212 = vld [vmem:[#allocation2 + $0x468] sm:$0xff]
    %v213 = vld [vmem:[#allocation2 + $0x470] sm:$0xff]
    %v214 = vld [vmem:[#allocation2 + $0x478] sm:$0xff]
    %v215 = vld [vmem:[#allocation2 + $0x480] sm:$0xff]
    %v216 = vld [vmem:[#allocation2 + $0x488] sm:$0xff]
    %v217 = vld [vmem:[#allocation2 + $0x490] sm:$0xff]
    %v218 = vld [vmem:[#allocation2 + $0x498] sm:$0xff]
    %v219 = vld [vmem:[#allocation2 + $0x4a0] sm:$0xff]
    %v220 = vld [vmem:[#allocation2 + $0x4a8] sm:$0xff]
    %v221 = vld [vmem:[#allocation2 + $0x4b0] sm:$0xff]
    %v222 = vld [vmem:[#allocation2 + $0x4b8] sm:$0xff]
    %v223 = vld [vmem:[#allocation2 + $0x4c0] sm:$0xff]
    %v224 = vld [vmem:[#allocation2 + $0x4c8] sm:$0xff]
    %v225 = vld [vmem:[#allocation2 + $0x4d0] sm:$0xff]
    %v226 = vld [vmem:[#allocation2 + $0x4d8] sm:$0xff]
    %v227 = vld [vmem:[#allocation2 + $0x4e0] sm:$0xff]
    %v228 = vld [vmem:[#allocation2 + $0x4e8] sm:$0xff]
    %v229 = vld [vmem:[#allocation2 + $0x4f0] sm:$0xff]
    %v230 = vld [vmem:[#allocation2 + $0x4f8] sm:$0xff]
    %v231 = vld [vmem:[#allocation2 + $0x500] sm:$0xff]
    %v232 = vld [vmem:[#allocation2 + $0x508] sm:$0xff]
    %v233 = vld [vmem:[#allocation2 + $0x510] sm:$0xff]
    %v234 = vld [vmem:[#allocation2 + $0x518] sm:$0xff]
    %v235 = vld [vmem:[#allocation2 + $0x520] sm:$0xff]
    %v236 = vld [vmem:[#allocation2 + $0x528] sm:$0xff]
    %v237 = vld [vmem:[#allocation2 + $0x530] sm:$0xff]
    %v238 = vld [vmem:[#allocation2 + $0x538] sm:$0xff]
    %v239 = vld [vmem:[#allocation2 + $0x540] sm:$0xff]
    %v240 = vld [vmem:[#allocation2 + $0x548] sm:$0xff]
    %v241 = vld [vmem:[#allocation2 + $0x550] sm:$0xff]
    %v242 = vld [vmem:[#allocation2 + $0x558] sm:$0xff]
    %v243 = vld [vmem:[#allocation2 + $0x560] sm:$0xff]
    %v244 = vld [vmem:[#allocation2 + $0x568] sm:$0xff]
    %v245 = vld [vmem:[#allocation2 + $0x570] sm:$0xff]
    %v246 = vld [vmem:[#allocation2 + $0x578] sm:$0xff]
    %v247 = vld [vmem:[#allocation2 + $0x580] sm:$0xff]
    %v248 = vld [vmem:[#allocation2 + $0x588] sm:$0xff]
    %v249 = vld [vmem:[#allocation2 + $0x590] sm:$0xff]
    %v250 = vld [vmem:[#allocation2 + $0x598] sm:$0xff]
    %v251 = vld [vmem:[#allocation2 + $0x5a0] sm:$0xff]
    %v252 = vld [vmem:[#allocation2 + $0x5a8] sm:$0xff]
    %v253 = vld [vmem:[#allocation2 + $0x5b0] sm:$0xff]
    %v254 = vld [vmem:[#allocation2 + $0x5b8] sm:$0xff]
    %v255 = vld [vmem:[#allocation2 + $0x5c0] sm:$0xff]
    %v256 = vld [vmem:[#allocation2 + $0x5c8] sm:$0xff]
    %v257 = vld [vmem:[#allocation2 + $0x5d0] sm:$0xff]
    %v258 = vld [vmem:[#allocation2 + $0x5d8] sm:$0xff]
    %v259 = vld [vmem:[#allocation2 + $0x5e0] sm:$0xff]
    %v260 = vld [vmem:[#allocation2 + $0x5e8] sm:$0xff]
    %v261 = vld [vmem:[#allocation2 + $0x5f0] sm:$0xff]
    %v262 = vld [vmem:[#allocation2 + $0x5f8] sm:$0xff]
    %v263 = vld [vmem:[#allocation2 + $0x600] sm:$0xff]
    %v264 = vld [vmem:[#allocation2 + $0x608] sm:$0xff]
    %v265 = vld [vmem:[#allocation2 + $0x610] sm:$0xff]
    %v266 = vld [vmem:[#allocation2 + $0x618] sm:$0xff]
    %v267 = vld [vmem:[#allocation2 + $0x620] sm:$0xff]
    %v268 = vld [vmem:[#allocation2 + $0x628] sm:$0xff]
    %v269 = vld [vmem:[#allocation2 + $0x630] sm:$0xff]
    %v270 = vld [vmem:[#allocation2 + $0x638] sm:$0xff]
    %v271 = vld [vmem:[#allocation2 + $0x640] sm:$0xff]
    %v272 = vld [vmem:[#allocation2 + $0x648] sm:$0xff]
    %v273 = vld [vmem:[#allocation2 + $0x650] sm:$0xff]
    %v274 = vld [vmem:[#allocation2 + $0x658] sm:$0xff]
    %v275 = vld [vmem:[#allocation2 + $0x660] sm:$0xff]
    %v276 = vld [vmem:[#allocation2 + $0x668] sm:$0xff]
    %v277 = vld [vmem:[#allocation2 + $0x670] sm:$0xff]
    %v278 = vld [vmem:[#allocation2 + $0x678] sm:$0xff]
    %v279 = vld [vmem:[#allocation2 + $0x680] sm:$0xff]
    %v280 = vld [vmem:[#allocation2 + $0x688] sm:$0xff]
    %v281 = vld [vmem:[#allocation2 + $0x690] sm:$0xff]
    %v282 = vld [vmem:[#allocation2 + $0x698] sm:$0xff]
    %v283 = vld [vmem:[#allocation2 + $0x6a0] sm:$0xff]
    %v284 = vld [vmem:[#allocation2 + $0x6a8] sm:$0xff]
    %v285 = vld [vmem:[#allocation2 + $0x6b0] sm:$0xff]
    %v286 = vld [vmem:[#allocation2 + $0x6b8] sm:$0xff]
    %v287 = vld [vmem:[#allocation2 + $0x6c0] sm:$0xff]
    %v288 = vld [vmem:[#allocation2 + $0x6c8] sm:$0xff]
    %v289 = vld [vmem:[#allocation2 + $0x6d0] sm:$0xff]
    %v290 = vld [vmem:[#allocation2 + $0x6d8] sm:$0xff]
    %v291 = vld [vmem:[#allocation2 + $0x6e0] sm:$0xff]
    %v292 = vld [vmem:[#allocation2 + $0x6e8] sm:$0xff]
    %v293 = vld [vmem:[#allocation2 + $0x6f0] sm:$0xff]
    %v294 = vld [vmem:[#allocation2 + $0x6f8] sm:$0xff]
    %v295 = vld [vmem:[#allocation2 + $0x700] sm:$0xff]
    %v296 = vld [vmem:[#allocation2 + $0x708] sm:$0xff]
    %v297 = vld [vmem:[#allocation2 + $0x710] sm:$0xff]
    %v298 = vld [vmem:[#allocation2 + $0x718] sm:$0xff]
    %v299 = vld [vmem:[#allocation2 + $0x720] sm:$0xff]
    %v300 = vld [vmem:[#allocation2 + $0x728] sm:$0xff]
    %v301 = vld [vmem:[#allocation2 + $0x730] sm:$0xff]
    %v302 = vld [vmem:[#allocation2 + $0x738] sm:$0xff]
    %v303 = vld [vmem:[#allocation2 + $0x740] sm:$0xff]
    %v304 = vld [vmem:[#allocation2 + $0x748] sm:$0xff]
    %v305 = vld [vmem:[#allocation2 + $0x750] sm:$0xff]
    %v306 = vld [vmem:[#allocation2 + $0x758] sm:$0xff]
    %v307 = vld [vmem:[#allocation2 + $0x760] sm:$0xff]
    %v308 = vld [vmem:[#allocation2 + $0x768] sm:$0xff]
    %v309 = vld [vmem:[#allocation2 + $0x770] sm:$0xff]
    %v310 = vld [vmem:[#allocation2 + $0x778] sm:$0xff]
    %v311 = vld [vmem:[#allocation2 + $0x780] sm:$0xff]
    %v312 = vld [vmem:[#allocation2 + $0x788] sm:$0xff]
    %v313 = vld [vmem:[#allocation2 + $0x790] sm:$0xff]
    %v314 = vld [vmem:[#allocation2 + $0x798] sm:$0xff]
    %v315 = vld [vmem:[#allocation2 + $0x7a0] sm:$0xff]
    %v316 = vld [vmem:[#allocation2 + $0x7a8] sm:$0xff]
    %v317 = vld [vmem:[#allocation2 + $0x7b0] sm:$0xff]
    %v318 = vld [vmem:[#allocation2 + $0x7b8] sm:$0xff]
    %v319 = vld [vmem:[#allocation2 + $0x7c0] sm:$0xff]
    %v320 = vld [vmem:[#allocation2 + $0x7c8] sm:$0xff]
    %v321 = vld [vmem:[#allocation2 + $0x7d0] sm:$0xff]
    %v322 = vld [vmem:[#allocation2 + $0x7d8] sm:$0xff]
    %v323 = vld [vmem:[#allocation2 + $0x7e0] sm:$0xff]
    %v324 = vld [vmem:[#allocation2 + $0x7e8] sm:$0xff]
    %v325 = vld [vmem:[#allocation2 + $0x7f0] sm:$0xff]
    %v326 = vld [vmem:[#allocation2 + $0x7f8] sm:$0xff]
    %v329 = vlaneseq
    %v330 = vshrl.u32 %v329, 7
    %v331 = vsub.s32 0, %v330
    %v332 = vrot.slane %v69, %v331
    %v333 = vlaneseq
    %v334 = vshrl.u32 %v333, 7
    %v335 = vsub.s32 4, %v334
    %v336 = vrot.slane %v69, %v335
    %v337 = vlaneseq
    %v338 = vshrl.u32 %v337, 7
    %v339 = vsub.s32 0, %v338
    %v340 = vrot.slane %v70, %v339
    %v341 = vlaneseq
    %v342 = vshrl.u32 %v341, 7
    %v343 = vsub.s32 4, %v342
    %v344 = vrot.slane %v70, %v343
    %v349 = vlaneseq
    %v350 = vshrl.u32 %v349, 7
    %v351 = vsub.s32 0, %v350
    %v352 = vrot.slane %v332, %v351
    %v353 = vlaneseq
    %v354 = vshrl.u32 %v353, 7
    %v355 = vsub.s32 0, %v354
    %v356 = vrot.slane %v336, %v355
    %v357 = vlaneseq
    %v358 = vshrl.u32 %v357, 7
    %v359 = vsub.s32 0, %v358
    %v360 = vrot.slane %v340, %v359
    %v361 = vlaneseq
    %v362 = vshrl.u32 %v361, 7
    %v363 = vsub.s32 0, %v362
    %v364 = vrot.slane %v344, %v363
    %v369 = vunpack.c.l.b16 %v65
    %v370 = vunpack.c.h.b16 %v65
    %v371 = vunpack.c.l.b16 %v66
    %v372 = vunpack.c.h.b16 %v66
    %v373 = vunpack.c.l.b16 %v67
    %v374 = vunpack.c.h.b16 %v67
    %v375 = vunpack.c.l.b16 %v68
    %v376 = vunpack.c.h.b16 %v68
    %v377 = vpack.c.b16 %v369, %v369
    %v378 = vpack.c.b16 %v370, %v370
    %v379 = vpack.c.b16 %v371, %v371
    %v380 = vpack.c.b16 %v372, %v372
    %v381 = vpack.c.b16 %v373, %v373
    %v382 = vpack.c.b16 %v374, %v374
    %v383 = vpack.c.b16 %v375, %v375
    %v384 = vpack.c.b16 %v376, %v376
    %v649 = vunpack.c.l.b16 %v71
    %v650 = vunpack.c.h.b16 %v71
    %v651 = vunpack.c.l.b16 %v72
    %v652 = vunpack.c.h.b16 %v72
    %v653 = vunpack.c.l.b16 %v73
    %v654 = vunpack.c.h.b16 %v73
    %v655 = vunpack.c.l.b16 %v74
    %v656 = vunpack.c.h.b16 %v74
    %v657 = vunpack.c.l.b16 %v75
    %v658 = vunpack.c.h.b16 %v75
    %v659 = vunpack.c.l.b16 %v76
    %v660 = vunpack.c.h.b16 %v76
    %v661 = vunpack.c.l.b16 %v77
    %v662 = vunpack.c.h.b16 %v77
    %v663 = vunpack.c.l.b16 %v78
    %v664 = vunpack.c.h.b16 %v78
    %v665 = vunpack.c.l.b16 %v79
    %v666 = vunpack.c.h.b16 %v79
    %v667 = vunpack.c.l.b16 %v80
    %v668 = vunpack.c.h.b16 %v80
    %v669 = vunpack.c.l.b16 %v81
    %v670 = vunpack.c.h.b16 %v81
    %v671 = vunpack.c.l.b16 %v82
    %v672 = vunpack.c.h.b16 %v82
    %v673 = vunpack.c.l.b16 %v83
    %v674 = vunpack.c.h.b16 %v83
    %v675 = vunpack.c.l.b16 %v84
    %v676 = vunpack.c.h.b16 %v84
    %v677 = vunpack.c.l.b16 %v85
    %v678 = vunpack.c.h.b16 %v85
    %v679 = vunpack.c.l.b16 %v86
    %v680 = vunpack.c.h.b16 %v86
    %v681 = vunpack.c.l.b16 %v87
    %v682 = vunpack.c.h.b16 %v87
    %v683 = vunpack.c.l.b16 %v88
    %v684 = vunpack.c.h.b16 %v88
    %v685 = vunpack.c.l.b16 %v89
    %v686 = vunpack.c.h.b16 %v89
    %v687 = vunpack.c.l.b16 %v90
    %v688 = vunpack.c.h.b16 %v90
    %v689 = vunpack.c.l.b16 %v91
    %v690 = vunpack.c.h.b16 %v91
    %v691 = vunpack.c.l.b16 %v92
    %v692 = vunpack.c.h.b16 %v92
    %v693 = vunpack.c.l.b16 %v93
    %v694 = vunpack.c.h.b16 %v93
    %v695 = vunpack.c.l.b16 %v94
    %v696 = vunpack.c.h.b16 %v94
    %v697 = vunpack.c.l.b16 %v95
    %v698 = vunpack.c.h.b16 %v95
    %v699 = vunpack.c.l.b16 %v96
    %v700 = vunpack.c.h.b16 %v96
    %v701 = vunpack.c.l.b16 %v97
    %v702 = vunpack.c.h.b16 %v97
    %v703 = vunpack.c.l.b16 %v98
    %v704 = vunpack.c.h.b16 %v98
    %v705 = vunpack.c.l.b16 %v99
    %v706 = vunpack.c.h.b16 %v99
    %v707 = vunpack.c.l.b16 %v100
    %v708 = vunpack.c.h.b16 %v100
    %v709 = vunpack.c.l.b16 %v101
    %v710 = vunpack.c.h.b16 %v101
    %v711 = vunpack.c.l.b16 %v102
    %v712 = vunpack.c.h.b16 %v102
    %v713 = vunpack.c.l.b16 %v103
    %v714 = vunpack.c.h.b16 %v103
    %v715 = vunpack.c.l.b16 %v104
    %v716 = vunpack.c.h.b16 %v104
    %v717 = vunpack.c.l.b16 %v105
    %v718 = vunpack.c.h.b16 %v105
    %v719 = vunpack.c.l.b16 %v106
    %v720 = vunpack.c.h.b16 %v106
    %v721 = vunpack.c.l.b16 %v107
    %v722 = vunpack.c.h.b16 %v107
    %v723 = vunpack.c.l.b16 %v108
    %v724 = vunpack.c.h.b16 %v108
    %v725 = vunpack.c.l.b16 %v109
    %v726 = vunpack.c.h.b16 %v109
    %v727 = vunpack.c.l.b16 %v110
    %v728 = vunpack.c.h.b16 %v110
    %v729 = vunpack.c.l.b16 %v111
    %v730 = vunpack.c.h.b16 %v111
    %v731 = vunpack.c.l.b16 %v112
    %v732 = vunpack.c.h.b16 %v112
    %v733 = vunpack.c.l.b16 %v113
    %v734 = vunpack.c.h.b16 %v113
    %v735 = vunpack.c.l.b16 %v114
    %v736 = vunpack.c.h.b16 %v114
    %v737 = vunpack.c.l.b16 %v115
    %v738 = vunpack.c.h.b16 %v115
    %v739 = vunpack.c.l.b16 %v116
    %v740 = vunpack.c.h.b16 %v116
    %v741 = vunpack.c.l.b16 %v117
    %v742 = vunpack.c.h.b16 %v117
    %v743 = vunpack.c.l.b16 %v118
    %v744 = vunpack.c.h.b16 %v118
    %v745 = vunpack.c.l.b16 %v119
    %v746 = vunpack.c.h.b16 %v119
    %v747 = vunpack.c.l.b16 %v120
    %v748 = vunpack.c.h.b16 %v120
    %v749 = vunpack.c.l.b16 %v121
    %v750 = vunpack.c.h.b16 %v121
    %v751 = vunpack.c.l.b16 %v122
    %v752 = vunpack.c.h.b16 %v122
    %v753 = vunpack.c.l.b16 %v123
    %v754 = vunpack.c.h.b16 %v123
    %v755 = vunpack.c.l.b16 %v124
    %v756 = vunpack.c.h.b16 %v124
    %v757 = vunpack.c.l.b16 %v125
    %v758 = vunpack.c.h.b16 %v125
    %v759 = vunpack.c.l.b16 %v126
    %v760 = vunpack.c.h.b16 %v126
    %v761 = vunpack.c.l.b16 %v127
    %v762 = vunpack.c.h.b16 %v127
    %v763 = vunpack.c.l.b16 %v128
    %v764 = vunpack.c.h.b16 %v128
    %v765 = vunpack.c.l.b16 %v129
    %v766 = vunpack.c.h.b16 %v129
    %v767 = vunpack.c.l.b16 %v130
    %v768 = vunpack.c.h.b16 %v130
    %v769 = vunpack.c.l.b16 %v131
    %v770 = vunpack.c.h.b16 %v131
    %v771 = vunpack.c.l.b16 %v132
    %v772 = vunpack.c.h.b16 %v132
    %v773 = vunpack.c.l.b16 %v133
    %v774 = vunpack.c.h.b16 %v133
    %v775 = vunpack.c.l.b16 %v134
    %v776 = vunpack.c.h.b16 %v134
    %v777 = vunpack.c.l.b16 %v135
    %v778 = vunpack.c.h.b16 %v135
    %v779 = vunpack.c.l.b16 %v136
    %v780 = vunpack.c.h.b16 %v136
    %v781 = vunpack.c.l.b16 %v137
    %v782 = vunpack.c.h.b16 %v137
    %v783 = vunpack.c.l.b16 %v138
    %v784 = vunpack.c.h.b16 %v138
    %v785 = vunpack.c.l.b16 %v139
    %v786 = vunpack.c.h.b16 %v139
    %v787 = vunpack.c.l.b16 %v140
    %v788 = vunpack.c.h.b16 %v140
    %v789 = vunpack.c.l.b16 %v141
    %v790 = vunpack.c.h.b16 %v141
    %v791 = vunpack.c.l.b16 %v142
    %v792 = vunpack.c.h.b16 %v142
    %v793 = vunpack.c.l.b16 %v143
    %v794 = vunpack.c.h.b16 %v143
    %v795 = vunpack.c.l.b16 %v144
    %v796 = vunpack.c.h.b16 %v144
    %v797 = vunpack.c.l.b16 %v145
    %v798 = vunpack.c.h.b16 %v145
    %v799 = vunpack.c.l.b16 %v146
    %v800 = vunpack.c.h.b16 %v146
    %v801 = vunpack.c.l.b16 %v147
    %v802 = vunpack.c.h.b16 %v147
    %v803 = vunpack.c.l.b16 %v148
    %v804 = vunpack.c.h.b16 %v148
    %v805 = vunpack.c.l.b16 %v149
    %v806 = vunpack.c.h.b16 %v149
    %v807 = vunpack.c.l.b16 %v150
    %v808 = vunpack.c.h.b16 %v150
    %v809 = vunpack.c.l.b16 %v151
    %v810 = vunpack.c.h.b16 %v151
    %v811 = vunpack.c.l.b16 %v152
    %v812 = vunpack.c.h.b16 %v152
    %v813 = vunpack.c.l.b16 %v153
    %v814 = vunpack.c.h.b16 %v153
    %v815 = vunpack.c.l.b16 %v154
    %v816 = vunpack.c.h.b16 %v154
    %v817 = vunpack.c.l.b16 %v155
    %v818 = vunpack.c.h.b16 %v155
    %v819 = vunpack.c.l.b16 %v156
    %v820 = vunpack.c.h.b16 %v156
    %v821 = vunpack.c.l.b16 %v157
    %v822 = vunpack.c.h.b16 %v157
    %v823 = vunpack.c.l.b16 %v158
    %v824 = vunpack.c.h.b16 %v158
    %v825 = vunpack.c.l.b16 %v159
    %v826 = vunpack.c.h.b16 %v159
    %v827 = vunpack.c.l.b16 %v160
    %v828 = vunpack.c.h.b16 %v160
    %v829 = vunpack.c.l.b16 %v161
    %v830 = vunpack.c.h.b16 %v161
    %v831 = vunpack.c.l.b16 %v162
    %v832 = vunpack.c.h.b16 %v162
    %v833 = vunpack.c.l.b16 %v163
    %v834 = vunpack.c.h.b16 %v163
    %v835 = vunpack.c.l.b16 %v164
    %v836 = vunpack.c.h.b16 %v164
    %v837 = vunpack.c.l.b16 %v165
    %v838 = vunpack.c.h.b16 %v165
    %v839 = vunpack.c.l.b16 %v166
    %v840 = vunpack.c.h.b16 %v166
    %v841 = vunpack.c.l.b16 %v167
    %v842 = vunpack.c.h.b16 %v167
    %v843 = vunpack.c.l.b16 %v168
    %v844 = vunpack.c.h.b16 %v168
    %v845 = vunpack.c.l.b16 %v169
    %v846 = vunpack.c.h.b16 %v169
    %v847 = vunpack.c.l.b16 %v170
    %v848 = vunpack.c.h.b16 %v170
    %v849 = vunpack.c.l.b16 %v171
    %v850 = vunpack.c.h.b16 %v171
    %v851 = vunpack.c.l.b16 %v172
    %v852 = vunpack.c.h.b16 %v172
    %v853 = vunpack.c.l.b16 %v173
    %v854 = vunpack.c.h.b16 %v173
    %v855 = vunpack.c.l.b16 %v174
    %v856 = vunpack.c.h.b16 %v174
    %v857 = vunpack.c.l.b16 %v175
    %v858 = vunpack.c.h.b16 %v175
    %v859 = vunpack.c.l.b16 %v176
    %v860 = vunpack.c.h.b16 %v176
    %v861 = vunpack.c.l.b16 %v177
    %v862 = vunpack.c.h.b16 %v177
    %v863 = vunpack.c.l.b16 %v178
    %v864 = vunpack.c.h.b16 %v178
    %v865 = vunpack.c.l.b16 %v179
    %v866 = vunpack.c.h.b16 %v179
    %v867 = vunpack.c.l.b16 %v180
    %v868 = vunpack.c.h.b16 %v180
    %v869 = vunpack.c.l.b16 %v181
    %v870 = vunpack.c.h.b16 %v181
    %v871 = vunpack.c.l.b16 %v182
    %v872 = vunpack.c.h.b16 %v182
    %v873 = vunpack.c.l.b16 %v183
    %v874 = vunpack.c.h.b16 %v183
    %v875 = vunpack.c.l.b16 %v184
    %v876 = vunpack.c.h.b16 %v184
    %v877 = vunpack.c.l.b16 %v185
    %v878 = vunpack.c.h.b16 %v185
    %v879 = vunpack.c.l.b16 %v186
    %v880 = vunpack.c.h.b16 %v186
    %v881 = vunpack.c.l.b16 %v187
    %v882 = vunpack.c.h.b16 %v187
    %v883 = vunpack.c.l.b16 %v188
    %v884 = vunpack.c.h.b16 %v188
    %v885 = vunpack.c.l.b16 %v189
    %v886 = vunpack.c.h.b16 %v189
    %v887 = vunpack.c.l.b16 %v190
    %v888 = vunpack.c.h.b16 %v190
    %v889 = vunpack.c.l.b16 %v191
    %v890 = vunpack.c.h.b16 %v191
    %v891 = vunpack.c.l.b16 %v192
    %v892 = vunpack.c.h.b16 %v192
    %v893 = vunpack.c.l.b16 %v193
    %v894 = vunpack.c.h.b16 %v193
    %v895 = vunpack.c.l.b16 %v194
    %v896 = vunpack.c.h.b16 %v194
    %v897 = vunpack.c.l.b16 %v195
    %v898 = vunpack.c.h.b16 %v195
    %v899 = vunpack.c.l.b16 %v196
    %v900 = vunpack.c.h.b16 %v196
    %v901 = vunpack.c.l.b16 %v197
    %v902 = vunpack.c.h.b16 %v197
    %v903 = vunpack.c.l.b16 %v198
    %v904 = vunpack.c.h.b16 %v198
    %v905 = vunpack.c.l.b16 %v199
    %v906 = vunpack.c.h.b16 %v199
    %v907 = vunpack.c.l.b16 %v200
    %v908 = vunpack.c.h.b16 %v200
    %v909 = vunpack.c.l.b16 %v201
    %v910 = vunpack.c.h.b16 %v201
    %v911 = vunpack.c.l.b16 %v202
    %v912 = vunpack.c.h.b16 %v202
    %v913 = vunpack.c.l.b16 %v203
    %v914 = vunpack.c.h.b16 %v203
    %v915 = vunpack.c.l.b16 %v204
    %v916 = vunpack.c.h.b16 %v204
    %v917 = vunpack.c.l.b16 %v205
    %v918 = vunpack.c.h.b16 %v205
    %v919 = vunpack.c.l.b16 %v206
    %v920 = vunpack.c.h.b16 %v206
    %v921 = vunpack.c.l.b16 %v207
    %v922 = vunpack.c.h.b16 %v207
    %v923 = vunpack.c.l.b16 %v208
    %v924 = vunpack.c.h.b16 %v208
    %v925 = vunpack.c.l.b16 %v209
    %v926 = vunpack.c.h.b16 %v209
    %v927 = vunpack.c.l.b16 %v210
    %v928 = vunpack.c.h.b16 %v210
    %v929 = vunpack.c.l.b16 %v211
    %v930 = vunpack.c.h.b16 %v211
    %v931 = vunpack.c.l.b16 %v212
    %v932 = vunpack.c.h.b16 %v212
    %v933 = vunpack.c.l.b16 %v213
    %v934 = vunpack.c.h.b16 %v213
    %v935 = vunpack.c.l.b16 %v214
    %v936 = vunpack.c.h.b16 %v214
    %v937 = vunpack.c.l.b16 %v215
    %v938 = vunpack.c.h.b16 %v215
    %v939 = vunpack.c.l.b16 %v216
    %v940 = vunpack.c.h.b16 %v216
    %v941 = vunpack.c.l.b16 %v217
    %v942 = vunpack.c.h.b16 %v217
    %v943 = vunpack.c.l.b16 %v218
    %v944 = vunpack.c.h.b16 %v218
    %v945 = vunpack.c.l.b16 %v219
    %v946 = vunpack.c.h.b16 %v219
    %v947 = vunpack.c.l.b16 %v220
    %v948 = vunpack.c.h.b16 %v220
    %v949 = vunpack.c.l.b16 %v221
    %v950 = vunpack.c.h.b16 %v221
    %v951 = vunpack.c.l.b16 %v222
    %v952 = vunpack.c.h.b16 %v222
    %v953 = vunpack.c.l.b16 %v223
    %v954 = vunpack.c.h.b16 %v223
    %v955 = vunpack.c.l.b16 %v224
    %v956 = vunpack.c.h.b16 %v224
    %v957 = vunpack.c.l.b16 %v225
    %v958 = vunpack.c.h.b16 %v225
    %v959 = vunpack.c.l.b16 %v226
    %v960 = vunpack.c.h.b16 %v226
    %v961 = vunpack.c.l.b16 %v227
    %v962 = vunpack.c.h.b16 %v227
    %v963 = vunpack.c.l.b16 %v228
    %v964 = vunpack.c.h.b16 %v228
    %v965 = vunpack.c.l.b16 %v229
    %v966 = vunpack.c.h.b16 %v229
    %v967 = vunpack.c.l.b16 %v230
    %v968 = vunpack.c.h.b16 %v230
    %v969 = vunpack.c.l.b16 %v231
    %v970 = vunpack.c.h.b16 %v231
    %v971 = vunpack.c.l.b16 %v232
    %v972 = vunpack.c.h.b16 %v232
    %v973 = vunpack.c.l.b16 %v233
    %v974 = vunpack.c.h.b16 %v233
    %v975 = vunpack.c.l.b16 %v234
    %v976 = vunpack.c.h.b16 %v234
    %v977 = vunpack.c.l.b16 %v235
    %v978 = vunpack.c.h.b16 %v235
    %v979 = vunpack.c.l.b16 %v236
    %v980 = vunpack.c.h.b16 %v236
    %v981 = vunpack.c.l.b16 %v237
    %v982 = vunpack.c.h.b16 %v237
    %v983 = vunpack.c.l.b16 %v238
    %v984 = vunpack.c.h.b16 %v238
    %v985 = vunpack.c.l.b16 %v239
    %v986 = vunpack.c.h.b16 %v239
    %v987 = vunpack.c.l.b16 %v240
    %v988 = vunpack.c.h.b16 %v240
    %v989 = vunpack.c.l.b16 %v241
    %v990 = vunpack.c.h.b16 %v241
    %v991 = vunpack.c.l.b16 %v242
    %v992 = vunpack.c.h.b16 %v242
    %v993 = vunpack.c.l.b16 %v243
    %v994 = vunpack.c.h.b16 %v243
    %v995 = vunpack.c.l.b16 %v244
    %v996 = vunpack.c.h.b16 %v244
    %v997 = vunpack.c.l.b16 %v245
    %v998 = vunpack.c.h.b16 %v245
    %v999 = vunpack.c.l.b16 %v246
    %v1000 = vunpack.c.h.b16 %v246
    %v1001 = vunpack.c.l.b16 %v247
    %v1002 = vunpack.c.h.b16 %v247
    %v1003 = vunpack.c.l.b16 %v248
    %v1004 = vunpack.c.h.b16 %v248
    %v1005 = vunpack.c.l.b16 %v249
    %v1006 = vunpack.c.h.b16 %v249
    %v1007 = vunpack.c.l.b16 %v250
    %v1008 = vunpack.c.h.b16 %v250
    %v1009 = vunpack.c.l.b16 %v251
    %v1010 = vunpack.c.h.b16 %v251
    %v1011 = vunpack.c.l.b16 %v252
    %v1012 = vunpack.c.h.b16 %v252
    %v1013 = vunpack.c.l.b16 %v253
    %v1014 = vunpack.c.h.b16 %v253
    %v1015 = vunpack.c.l.b16 %v254
    %v1016 = vunpack.c.h.b16 %v254
    %v1017 = vunpack.c.l.b16 %v255
    %v1018 = vunpack.c.h.b16 %v255
    %v1019 = vunpack.c.l.b16 %v256
    %v1020 = vunpack.c.h.b16 %v256
    %v1021 = vunpack.c.l.b16 %v257
    %v1022 = vunpack.c.h.b16 %v257
    %v1023 = vunpack.c.l.b16 %v258
    %v1024 = vunpack.c.h.b16 %v258
    %v1025 = vunpack.c.l.b16 %v259
    %v1026 = vunpack.c.h.b16 %v259
    %v1027 = vunpack.c.l.b16 %v260
    %v1028 = vunpack.c.h.b16 %v260
    %v1029 = vunpack.c.l.b16 %v261
    %v1030 = vunpack.c.h.b16 %v261
    %v1031 = vunpack.c.l.b16 %v262
    %v1032 = vunpack.c.h.b16 %v262
    %v1033 = vunpack.c.l.b16 %v263
    %v1034 = vunpack.c.h.b16 %v263
    %v1035 = vunpack.c.l.b16 %v264
    %v1036 = vunpack.c.h.b16 %v264
    %v1037 = vunpack.c.l.b16 %v265
    %v1038 = vunpack.c.h.b16 %v265
    %v1039 = vunpack.c.l.b16 %v266
    %v1040 = vunpack.c.h.b16 %v266
    %v1041 = vunpack.c.l.b16 %v267
    %v1042 = vunpack.c.h.b16 %v267
    %v1043 = vunpack.c.l.b16 %v268
    %v1044 = vunpack.c.h.b16 %v268
    %v1045 = vunpack.c.l.b16 %v269
    %v1046 = vunpack.c.h.b16 %v269
    %v1047 = vunpack.c.l.b16 %v270
    %v1048 = vunpack.c.h.b16 %v270
    %v1049 = vunpack.c.l.b16 %v271
    %v1050 = vunpack.c.h.b16 %v271
    %v1051 = vunpack.c.l.b16 %v272
    %v1052 = vunpack.c.h.b16 %v272
    %v1053 = vunpack.c.l.b16 %v273
    %v1054 = vunpack.c.h.b16 %v273
    %v1055 = vunpack.c.l.b16 %v274
    %v1056 = vunpack.c.h.b16 %v274
    %v1057 = vunpack.c.l.b16 %v275
    %v1058 = vunpack.c.h.b16 %v275
    %v1059 = vunpack.c.l.b16 %v276
    %v1060 = vunpack.c.h.b16 %v276
    %v1061 = vunpack.c.l.b16 %v277
    %v1062 = vunpack.c.h.b16 %v277
    %v1063 = vunpack.c.l.b16 %v278
    %v1064 = vunpack.c.h.b16 %v278
    %v1065 = vunpack.c.l.b16 %v279
    %v1066 = vunpack.c.h.b16 %v279
    %v1067 = vunpack.c.l.b16 %v280
    %v1068 = vunpack.c.h.b16 %v280
    %v1069 = vunpack.c.l.b16 %v281
    %v1070 = vunpack.c.h.b16 %v281
    %v1071 = vunpack.c.l.b16 %v282
    %v1072 = vunpack.c.h.b16 %v282
    %v1073 = vunpack.c.l.b16 %v283
    %v1074 = vunpack.c.h.b16 %v283
    %v1075 = vunpack.c.l.b16 %v284
    %v1076 = vunpack.c.h.b16 %v284
    %v1077 = vunpack.c.l.b16 %v285
    %v1078 = vunpack.c.h.b16 %v285
    %v1079 = vunpack.c.l.b16 %v286
    %v1080 = vunpack.c.h.b16 %v286
    %v1081 = vunpack.c.l.b16 %v287
    %v1082 = vunpack.c.h.b16 %v287
    %v1083 = vunpack.c.l.b16 %v288
    %v1084 = vunpack.c.h.b16 %v288
    %v1085 = vunpack.c.l.b16 %v289
    %v1086 = vunpack.c.h.b16 %v289
    %v1087 = vunpack.c.l.b16 %v290
    %v1088 = vunpack.c.h.b16 %v290
    %v1089 = vunpack.c.l.b16 %v291
    %v1090 = vunpack.c.h.b16 %v291
    %v1091 = vunpack.c.l.b16 %v292
    %v1092 = vunpack.c.h.b16 %v292
    %v1093 = vunpack.c.l.b16 %v293
    %v1094 = vunpack.c.h.b16 %v293
    %v1095 = vunpack.c.l.b16 %v294
    %v1096 = vunpack.c.h.b16 %v294
    %v1097 = vunpack.c.l.b16 %v295
    %v1098 = vunpack.c.h.b16 %v295
    %v1099 = vunpack.c.l.b16 %v296
    %v1100 = vunpack.c.h.b16 %v296
    %v1101 = vunpack.c.l.b16 %v297
    %v1102 = vunpack.c.h.b16 %v297
    %v1103 = vunpack.c.l.b16 %v298
    %v1104 = vunpack.c.h.b16 %v298
    %v1105 = vunpack.c.l.b16 %v299
    %v1106 = vunpack.c.h.b16 %v299
    %v1107 = vunpack.c.l.b16 %v300
    %v1108 = vunpack.c.h.b16 %v300
    %v1109 = vunpack.c.l.b16 %v301
    %v1110 = vunpack.c.h.b16 %v301
    %v1111 = vunpack.c.l.b16 %v302
    %v1112 = vunpack.c.h.b16 %v302
    %v1113 = vunpack.c.l.b16 %v303
    %v1114 = vunpack.c.h.b16 %v303
    %v1115 = vunpack.c.l.b16 %v304
    %v1116 = vunpack.c.h.b16 %v304
    %v1117 = vunpack.c.l.b16 %v305
    %v1118 = vunpack.c.h.b16 %v305
    %v1119 = vunpack.c.l.b16 %v306
    %v1120 = vunpack.c.h.b16 %v306
    %v1121 = vunpack.c.l.b16 %v307
    %v1122 = vunpack.c.h.b16 %v307
    %v1123 = vunpack.c.l.b16 %v308
    %v1124 = vunpack.c.h.b16 %v308
    %v1125 = vunpack.c.l.b16 %v309
    %v1126 = vunpack.c.h.b16 %v309
    %v1127 = vunpack.c.l.b16 %v310
    %v1128 = vunpack.c.h.b16 %v310
    %v1129 = vunpack.c.l.b16 %v311
    %v1130 = vunpack.c.h.b16 %v311
    %v1131 = vunpack.c.l.b16 %v312
    %v1132 = vunpack.c.h.b16 %v312
    %v1133 = vunpack.c.l.b16 %v313
    %v1134 = vunpack.c.h.b16 %v313
    %v1135 = vunpack.c.l.b16 %v314
    %v1136 = vunpack.c.h.b16 %v314
    %v1137 = vunpack.c.l.b16 %v315
    %v1138 = vunpack.c.h.b16 %v315
    %v1139 = vunpack.c.l.b16 %v316
    %v1140 = vunpack.c.h.b16 %v316
    %v1141 = vunpack.c.l.b16 %v317
    %v1142 = vunpack.c.h.b16 %v317
    %v1143 = vunpack.c.l.b16 %v318
    %v1144 = vunpack.c.h.b16 %v318
    %v1145 = vunpack.c.l.b16 %v319
    %v1146 = vunpack.c.h.b16 %v319
    %v1147 = vunpack.c.l.b16 %v320
    %v1148 = vunpack.c.h.b16 %v320
    %v1149 = vunpack.c.l.b16 %v321
    %v1150 = vunpack.c.h.b16 %v321
    %v1151 = vunpack.c.l.b16 %v322
    %v1152 = vunpack.c.h.b16 %v322
    %v1153 = vunpack.c.l.b16 %v323
    %v1154 = vunpack.c.h.b16 %v323
    %v1155 = vunpack.c.l.b16 %v324
    %v1156 = vunpack.c.h.b16 %v324
    %v1157 = vunpack.c.l.b16 %v325
    %v1158 = vunpack.c.h.b16 %v325
    %v1159 = vunpack.c.l.b16 %v326
    %v1160 = vunpack.c.h.b16 %v326
    %v1161 = vpack.c.b16 %v653, %v649
    %v1162 = vpack.c.b16 %v654, %v650
    %v1163 = vpack.c.b16 %v655, %v651
    %v1164 = vpack.c.b16 %v656, %v652
    %v1165 = vpack.c.b16 %v661, %v657
    %v1166 = vpack.c.b16 %v662, %v658
    %v1167 = vpack.c.b16 %v663, %v659
    %v1168 = vpack.c.b16 %v664, %v660
    %v1169 = vpack.c.b16 %v669, %v665
    %v1170 = vpack.c.b16 %v670, %v666
    %v1171 = vpack.c.b16 %v671, %v667
    %v1172 = vpack.c.b16 %v672, %v668
    %v1173 = vpack.c.b16 %v677, %v673
    %v1174 = vpack.c.b16 %v678, %v674
    %v1175 = vpack.c.b16 %v679, %v675
    %v1176 = vpack.c.b16 %v680, %v676
    %v1177 = vpack.c.b16 %v685, %v681
    %v1178 = vpack.c.b16 %v686, %v682
    %v1179 = vpack.c.b16 %v687, %v683
    %v1180 = vpack.c.b16 %v688, %v684
    %v1181 = vpack.c.b16 %v693, %v689
    %v1182 = vpack.c.b16 %v694, %v690
    %v1183 = vpack.c.b16 %v695, %v691
    %v1184 = vpack.c.b16 %v696, %v692
    %v1185 = vpack.c.b16 %v701, %v697
    %v1186 = vpack.c.b16 %v702, %v698
    %v1187 = vpack.c.b16 %v703, %v699
    %v1188 = vpack.c.b16 %v704, %v700
    %v1189 = vpack.c.b16 %v709, %v705
    %v1190 = vpack.c.b16 %v710, %v706
    %v1191 = vpack.c.b16 %v711, %v707
    %v1192 = vpack.c.b16 %v712, %v708
    %v1193 = vpack.c.b16 %v717, %v713
    %v1194 = vpack.c.b16 %v718, %v714
    %v1195 = vpack.c.b16 %v719, %v715
    %v1196 = vpack.c.b16 %v720, %v716
    %v1197 = vpack.c.b16 %v725, %v721
    %v1198 = vpack.c.b16 %v726, %v722
    %v1199 = vpack.c.b16 %v727, %v723
    %v1200 = vpack.c.b16 %v728, %v724
    %v1201 = vpack.c.b16 %v733, %v729
    %v1202 = vpack.c.b16 %v734, %v730
    %v1203 = vpack.c.b16 %v735, %v731
    %v1204 = vpack.c.b16 %v736, %v732
    %v1205 = vpack.c.b16 %v741, %v737
    %v1206 = vpack.c.b16 %v742, %v738
    %v1207 = vpack.c.b16 %v743, %v739
    %v1208 = vpack.c.b16 %v744, %v740
    %v1209 = vpack.c.b16 %v749, %v745
    %v1210 = vpack.c.b16 %v750, %v746
    %v1211 = vpack.c.b16 %v751, %v747
    %v1212 = vpack.c.b16 %v752, %v748
    %v1213 = vpack.c.b16 %v757, %v753
    %v1214 = vpack.c.b16 %v758, %v754
    %v1215 = vpack.c.b16 %v759, %v755
    %v1216 = vpack.c.b16 %v760, %v756
    %v1217 = vpack.c.b16 %v765, %v761
    %v1218 = vpack.c.b16 %v766, %v762
    %v1219 = vpack.c.b16 %v767, %v763
    %v1220 = vpack.c.b16 %v768, %v764
    %v1221 = vpack.c.b16 %v773, %v769
    %v1222 = vpack.c.b16 %v774, %v770
    %v1223 = vpack.c.b16 %v775, %v771
    %v1224 = vpack.c.b16 %v776, %v772
    %v1225 = vpack.c.b16 %v781, %v777
    %v1226 = vpack.c.b16 %v782, %v778
    %v1227 = vpack.c.b16 %v783, %v779
    %v1228 = vpack.c.b16 %v784, %v780
    %v1229 = vpack.c.b16 %v789, %v785
    %v1230 = vpack.c.b16 %v790, %v786
    %v1231 = vpack.c.b16 %v791, %v787
    %v1232 = vpack.c.b16 %v792, %v788
    %v1233 = vpack.c.b16 %v797, %v793
    %v1234 = vpack.c.b16 %v798, %v794
    %v1235 = vpack.c.b16 %v799, %v795
    %v1236 = vpack.c.b16 %v800, %v796
    %v1237 = vpack.c.b16 %v805, %v801
    %v1238 = vpack.c.b16 %v806, %v802
    %v1239 = vpack.c.b16 %v807, %v803
    %v1240 = vpack.c.b16 %v808, %v804
    %v1241 = vpack.c.b16 %v813, %v809
    %v1242 = vpack.c.b16 %v814, %v810
    %v1243 = vpack.c.b16 %v815, %v811
    %v1244 = vpack.c.b16 %v816, %v812
    %v1245 = vpack.c.b16 %v821, %v817
    %v1246 = vpack.c.b16 %v822, %v818
    %v1247 = vpack.c.b16 %v823, %v819
    %v1248 = vpack.c.b16 %v824, %v820
    %v1249 = vpack.c.b16 %v829, %v825
    %v1250 = vpack.c.b16 %v830, %v826
    %v1251 = vpack.c.b16 %v831, %v827
    %v1252 = vpack.c.b16 %v832, %v828
    %v1253 = vpack.c.b16 %v837, %v833
    %v1254 = vpack.c.b16 %v838, %v834
    %v1255 = vpack.c.b16 %v839, %v835
    %v1256 = vpack.c.b16 %v840, %v836
    %v1257 = vpack.c.b16 %v845, %v841
    %v1258 = vpack.c.b16 %v846, %v842
    %v1259 = vpack.c.b16 %v847, %v843
    %v1260 = vpack.c.b16 %v848, %v844
    %v1261 = vpack.c.b16 %v853, %v849
    %v1262 = vpack.c.b16 %v854, %v850
    %v1263 = vpack.c.b16 %v855, %v851
    %v1264 = vpack.c.b16 %v856, %v852
    %v1265 = vpack.c.b16 %v861, %v857
    %v1266 = vpack.c.b16 %v862, %v858
    %v1267 = vpack.c.b16 %v863, %v859
    %v1268 = vpack.c.b16 %v864, %v860
    %v1269 = vpack.c.b16 %v869, %v865
    %v1270 = vpack.c.b16 %v870, %v866
    %v1271 = vpack.c.b16 %v871, %v867
    %v1272 = vpack.c.b16 %v872, %v868
    %v1273 = vpack.c.b16 %v877, %v873
    %v1274 = vpack.c.b16 %v878, %v874
    %v1275 = vpack.c.b16 %v879, %v875
    %v1276 = vpack.c.b16 %v880, %v876
    %v1277 = vpack.c.b16 %v885, %v881
    %v1278 = vpack.c.b16 %v886, %v882
    %v1279 = vpack.c.b16 %v887, %v883
    %v1280 = vpack.c.b16 %v888, %v884
    %v1281 = vpack.c.b16 %v893, %v889
    %v1282 = vpack.c.b16 %v894, %v890
    %v1283 = vpack.c.b16 %v895, %v891
    %v1284 = vpack.c.b16 %v896, %v892
    %v1285 = vpack.c.b16 %v901, %v897
    %v1286 = vpack.c.b16 %v902, %v898
    %v1287 = vpack.c.b16 %v903, %v899
    %v1288 = vpack.c.b16 %v904, %v900
    %v1289 = vpack.c.b16 %v909, %v905
    %v1290 = vpack.c.b16 %v910, %v906
    %v1291 = vpack.c.b16 %v911, %v907
    %v1292 = vpack.c.b16 %v912, %v908
    %v1293 = vpack.c.b16 %v917, %v913
    %v1294 = vpack.c.b16 %v918, %v914
    %v1295 = vpack.c.b16 %v919, %v915
    %v1296 = vpack.c.b16 %v920, %v916
    %v1297 = vpack.c.b16 %v925, %v921
    %v1298 = vpack.c.b16 %v926, %v922
    %v1299 = vpack.c.b16 %v927, %v923
    %v1300 = vpack.c.b16 %v928, %v924
    %v1301 = vpack.c.b16 %v933, %v929
    %v1302 = vpack.c.b16 %v934, %v930
    %v1303 = vpack.c.b16 %v935, %v931
    %v1304 = vpack.c.b16 %v936, %v932
    %v1305 = vpack.c.b16 %v941, %v937
    %v1306 = vpack.c.b16 %v942, %v938
    %v1307 = vpack.c.b16 %v943, %v939
    %v1308 = vpack.c.b16 %v944, %v940
    %v1309 = vpack.c.b16 %v949, %v945
    %v1310 = vpack.c.b16 %v950, %v946
    %v1311 = vpack.c.b16 %v951, %v947
    %v1312 = vpack.c.b16 %v952, %v948
    %v1313 = vpack.c.b16 %v957, %v953
    %v1314 = vpack.c.b16 %v958, %v954
    %v1315 = vpack.c.b16 %v959, %v955
    %v1316 = vpack.c.b16 %v960, %v956
    %v1317 = vpack.c.b16 %v965, %v961
    %v1318 = vpack.c.b16 %v966, %v962
    %v1319 = vpack.c.b16 %v967, %v963
    %v1320 = vpack.c.b16 %v968, %v964
    %v1321 = vpack.c.b16 %v973, %v969
    %v1322 = vpack.c.b16 %v974, %v970
    %v1323 = vpack.c.b16 %v975, %v971
    %v1324 = vpack.c.b16 %v976, %v972
    %v1325 = vpack.c.b16 %v981, %v977
    %v1326 = vpack.c.b16 %v982, %v978
    %v1327 = vpack.c.b16 %v983, %v979
    %v1328 = vpack.c.b16 %v984, %v980
    %v1329 = vpack.c.b16 %v989, %v985
    %v1330 = vpack.c.b16 %v990, %v986
    %v1331 = vpack.c.b16 %v991, %v987
    %v1332 = vpack.c.b16 %v992, %v988
    %v1333 = vpack.c.b16 %v997, %v993
    %v1334 = vpack.c.b16 %v998, %v994
    %v1335 = vpack.c.b16 %v999, %v995
    %v1336 = vpack.c.b16 %v1000, %v996
    %v1337 = vpack.c.b16 %v1005, %v1001
    %v1338 = vpack.c.b16 %v1006, %v1002
    %v1339 = vpack.c.b16 %v1007, %v1003
    %v1340 = vpack.c.b16 %v1008, %v1004
    %v1341 = vpack.c.b16 %v1013, %v1009
    %v1342 = vpack.c.b16 %v1014, %v1010
    %v1343 = vpack.c.b16 %v1015, %v1011
    %v1344 = vpack.c.b16 %v1016, %v1012
    %v1345 = vpack.c.b16 %v1021, %v1017
    %v1346 = vpack.c.b16 %v1022, %v1018
    %v1347 = vpack.c.b16 %v1023, %v1019
    %v1348 = vpack.c.b16 %v1024, %v1020
    %v1349 = vpack.c.b16 %v1029, %v1025
    %v1350 = vpack.c.b16 %v1030, %v1026
    %v1351 = vpack.c.b16 %v1031, %v1027
    %v1352 = vpack.c.b16 %v1032, %v1028
    %v1353 = vpack.c.b16 %v1037, %v1033
    %v1354 = vpack.c.b16 %v1038, %v1034
    %v1355 = vpack.c.b16 %v1039, %v1035
    %v1356 = vpack.c.b16 %v1040, %v1036
    %v1357 = vpack.c.b16 %v1045, %v1041
    %v1358 = vpack.c.b16 %v1046, %v1042
    %v1359 = vpack.c.b16 %v1047, %v1043
    %v1360 = vpack.c.b16 %v1048, %v1044
    %v1361 = vpack.c.b16 %v1053, %v1049
    %v1362 = vpack.c.b16 %v1054, %v1050
    %v1363 = vpack.c.b16 %v1055, %v1051
    %v1364 = vpack.c.b16 %v1056, %v1052
    %v1365 = vpack.c.b16 %v1061, %v1057
    %v1366 = vpack.c.b16 %v1062, %v1058
    %v1367 = vpack.c.b16 %v1063, %v1059
    %v1368 = vpack.c.b16 %v1064, %v1060
    %v1369 = vpack.c.b16 %v1069, %v1065
    %v1370 = vpack.c.b16 %v1070, %v1066
    %v1371 = vpack.c.b16 %v1071, %v1067
    %v1372 = vpack.c.b16 %v1072, %v1068
    %v1373 = vpack.c.b16 %v1077, %v1073
    %v1374 = vpack.c.b16 %v1078, %v1074
    %v1375 = vpack.c.b16 %v1079, %v1075
    %v1376 = vpack.c.b16 %v1080, %v1076
    %v1377 = vpack.c.b16 %v1085, %v1081
    %v1378 = vpack.c.b16 %v1086, %v1082
    %v1379 = vpack.c.b16 %v1087, %v1083
    %v1380 = vpack.c.b16 %v1088, %v1084
    %v1381 = vpack.c.b16 %v1093, %v1089
    %v1382 = vpack.c.b16 %v1094, %v1090
    %v1383 = vpack.c.b16 %v1095, %v1091
    %v1384 = vpack.c.b16 %v1096, %v1092
    %v1385 = vpack.c.b16 %v1101, %v1097
    %v1386 = vpack.c.b16 %v1102, %v1098
    %v1387 = vpack.c.b16 %v1103, %v1099
    %v1388 = vpack.c.b16 %v1104, %v1100
    %v1389 = vpack.c.b16 %v1109, %v1105
    %v1390 = vpack.c.b16 %v1110, %v1106
    %v1391 = vpack.c.b16 %v1111, %v1107
    %v1392 = vpack.c.b16 %v1112, %v1108
    %v1393 = vpack.c.b16 %v1117, %v1113
    %v1394 = vpack.c.b16 %v1118, %v1114
    %v1395 = vpack.c.b16 %v1119, %v1115
    %v1396 = vpack.c.b16 %v1120, %v1116
    %v1397 = vpack.c.b16 %v1125, %v1121
    %v1398 = vpack.c.b16 %v1126, %v1122
    %v1399 = vpack.c.b16 %v1127, %v1123
    %v1400 = vpack.c.b16 %v1128, %v1124
    %v1401 = vpack.c.b16 %v1133, %v1129
    %v1402 = vpack.c.b16 %v1134, %v1130
    %v1403 = vpack.c.b16 %v1135, %v1131
    %v1404 = vpack.c.b16 %v1136, %v1132
    %v1405 = vpack.c.b16 %v1141, %v1137
    %v1406 = vpack.c.b16 %v1142, %v1138
    %v1407 = vpack.c.b16 %v1143, %v1139
    %v1408 = vpack.c.b16 %v1144, %v1140
    %v1409 = vpack.c.b16 %v1149, %v1145
    %v1410 = vpack.c.b16 %v1150, %v1146
    %v1411 = vpack.c.b16 %v1151, %v1147
    %v1412 = vpack.c.b16 %v1152, %v1148
    %v1413 = vpack.c.b16 %v1157, %v1153
    %v1414 = vpack.c.b16 %v1158, %v1154
    %v1415 = vpack.c.b16 %v1159, %v1155
    %v1416 = vpack.c.b16 %v1160, %v1156
    %1673 = vmatprep.subr.bf16.mxu0 %v1162
    %1674 = vmatpush1.bf16.msra.mxu0 %v1161
    %1675 = vmatprep.subr.bf16.mxu0 %v1166
    %1676 = vmatpush1.bf16.msra.mxu0 %v1165
    %1677 = vmatprep.subr.bf16.mxu0 %v1170
    %1678 = vmatpush1.bf16.msra.mxu0 %v1169
    %1679 = vmatprep.subr.bf16.mxu0 %v1174
    %1680 = vmatpush1.bf16.msra.mxu0 %v1173
    %1681 = vmatprep.subr.bf16.mxu0 %v1178
    %1682 = vmatpush1.bf16.msra.mxu0 %v1177
    %1683 = vmatprep.subr.bf16.mxu0 %v1182
    %1684 = vmatpush1.bf16.msra.mxu0 %v1181
    %1685 = vmatprep.subr.bf16.mxu0 %v1186
    %1686 = vmatpush1.bf16.msra.mxu0 %v1185
    %1687 = vmatprep.subr.bf16.mxu0 %v1190
    %1688 = vmatpush1.bf16.msra.mxu0 %v1189
    %1689 = vmatprep.subr.bf16.mxu0 %v1194
    %1690 = vmatpush1.bf16.msra.mxu0 %v1193
    %1691 = vmatprep.subr.bf16.mxu0 %v1198
    %1692 = vmatpush1.bf16.msra.mxu0 %v1197
    %1693 = vmatprep.subr.bf16.mxu0 %v1202
    %1694 = vmatpush1.bf16.msra.mxu0 %v1201
    %1695 = vmatprep.subr.bf16.mxu0 %v1206
    %1696 = vmatpush1.bf16.msra.mxu0 %v1205
    %1697 = vmatprep.subr.bf16.mxu0 %v1210
    %1698 = vmatpush1.bf16.msra.mxu0 %v1209
    %1699 = vmatprep.subr.bf16.mxu0 %v1214
    %1700 = vmatpush1.bf16.msra.mxu0 %v1213
    %1701 = vmatprep.subr.bf16.mxu0 %v1218
    %1702 = vmatpush1.bf16.msra.mxu0 %v1217
    %1703 = vmatprep.subr.bf16.mxu0 %v1222
    %1704 = vmatpush1.bf16.msra.mxu0 %v1221
    %1705 = vmatprep.mubr.bf16.mxu0 %v378
    %1706 = vmatmul.mubr.bf16.gmra.mrb[0].mxu0 %v377
    %v1707 = vpop.f32.mrb[0].mxu0
    %v1708 = vadd.f32 %v352, %v1707
    %v1709 = vpop.f32.mrb[0].mxu0
    %v1710 = vadd.f32 %v356, %v1709
    %v1711 = vpop.f32.mrb[0].mxu0
    %v1712 = vpop.f32.mrb[0].mxu0
    %1713 = vdwg.mxu0
    %1714 = vmatprep.subr.bf16.mxu0 %v1226
    %1715 = vmatpush1.bf16.msra.mxu0 %v1225
    %1716 = vmatprep.subr.bf16.mxu0 %v1230
    %1717 = vmatpush1.bf16.msra.mxu0 %v1229
    %1718 = vmatprep.subr.bf16.mxu0 %v1234
    %1719 = vmatpush1.bf16.msra.mxu0 %v1233
    %1720 = vmatprep.subr.bf16.mxu0 %v1238
    %1721 = vmatpush1.bf16.msra.mxu0 %v1237
    %1722 = vmatprep.subr.bf16.mxu0 %v1242
    %1723 = vmatpush1.bf16.msra.mxu0 %v1241
    %1724 = vmatprep.subr.bf16.mxu0 %v1246
    %1725 = vmatpush1.bf16.msra.mxu0 %v1245
    %1726 = vmatprep.subr.bf16.mxu0 %v1250
    %1727 = vmatpush1.bf16.msra.mxu0 %v1249
    %1728 = vmatprep.subr.bf16.mxu0 %v1254
    %1729 = vmatpush1.bf16.msra.mxu0 %v1253
    %1730 = vmatprep.subr.bf16.mxu0 %v1258
    %1731 = vmatpush1.bf16.msra.mxu0 %v1257
    %1732 = vmatprep.subr.bf16.mxu0 %v1262
    %1733 = vmatpush1.bf16.msra.mxu0 %v1261
    %1734 = vmatprep.subr.bf16.mxu0 %v1266
    %1735 = vmatpush1.bf16.msra.mxu0 %v1265
    %1736 = vmatprep.subr.bf16.mxu0 %v1270
    %1737 = vmatpush1.bf16.msra.mxu0 %v1269
    %1738 = vmatprep.subr.bf16.mxu0 %v1274
    %1739 = vmatpush1.bf16.msra.mxu0 %v1273
    %1740 = vmatprep.subr.bf16.mxu0 %v1278
    %1741 = vmatpush1.bf16.msra.mxu0 %v1277
    %1742 = vmatprep.subr.bf16.mxu0 %v1282
    %1743 = vmatpush1.bf16.msra.mxu0 %v1281
    %1744 = vmatprep.subr.bf16.mxu0 %v1286
    %1745 = vmatpush1.bf16.msra.mxu0 %v1285
    %1746 = vmatprep.mubr.bf16.mxu0 %v380
    %1747 = vmatmul.mubr.bf16.gmra.mrb[0].mxu0 %v379
    %v1748 = vpop.f32.mrb[0].mxu0
    %v1749 = vadd.f32 %v1708, %v1748
    %v1750 = vpop.f32.mrb[0].mxu0
    %v1751 = vadd.f32 %v1710, %v1750
    %v1752 = vpop.f32.mrb[0].mxu0
    %v1753 = vpop.f32.mrb[0].mxu0
    %1754 = vdwg.mxu0
    %1755 = vmatprep.subr.bf16.mxu0 %v1290
    %1756 = vmatpush1.bf16.msra.mxu0 %v1289
    %1757 = vmatprep.subr.bf16.mxu0 %v1294
    %1758 = vmatpush1.bf16.msra.mxu0 %v1293
    %1759 = vmatprep.subr.bf16.mxu0 %v1298
    %1760 = vmatpush1.bf16.msra.mxu0 %v1297
    %1761 = vmatprep.subr.bf16.mxu0 %v1302
    %1762 = vmatpush1.bf16.msra.mxu0 %v1301
    %1763 = vmatprep.subr.bf16.mxu0 %v1306
    %1764 = vmatpush1.bf16.msra.mxu0 %v1305
    %1765 = vmatprep.subr.bf16.mxu0 %v1310
    %1766 = vmatpush1.bf16.msra.mxu0 %v1309
    %1767 = vmatprep.subr.bf16.mxu0 %v1314
    %1768 = vmatpush1.bf16.msra.mxu0 %v1313
    %1769 = vmatprep.subr.bf16.mxu0 %v1318
    %1770 = vmatpush1.bf16.msra.mxu0 %v1317
    %1771 = vmatprep.subr.bf16.mxu0 %v1322
    %1772 = vmatpush1.bf16.msra.mxu0 %v1321
    %1773 = vmatprep.subr.bf16.mxu0 %v1326
    %1774 = vmatpush1.bf16.msra.mxu0 %v1325
    %1775 = vmatprep.subr.bf16.mxu0 %v1330
    %1776 = vmatpush1.bf16.msra.mxu0 %v1329
    %1777 = vmatprep.subr.bf16.mxu0 %v1334
    %1778 = vmatpush1.bf16.msra.mxu0 %v1333
    %1779 = vmatprep.subr.bf16.mxu0 %v1338
    %1780 = vmatpush1.bf16.msra.mxu0 %v1337
    %1781 = vmatprep.subr.bf16.mxu0 %v1342
    %1782 = vmatpush1.bf16.msra.mxu0 %v1341
    %1783 = vmatprep.subr.bf16.mxu0 %v1346
    %1784 = vmatpush1.bf16.msra.mxu0 %v1345
    %1785 = vmatprep.subr.bf16.mxu0 %v1350
    %1786 = vmatpush1.bf16.msra.mxu0 %v1349
    %1787 = vmatprep.mubr.bf16.mxu0 %v382
    %1788 = vmatmul.mubr.bf16.gmra.mrb[0].mxu0 %v381
    %v1789 = vpop.f32.mrb[0].mxu0
    %v1790 = vadd.f32 %v1749, %v1789
    %v1791 = vpop.f32.mrb[0].mxu0
    %v1792 = vadd.f32 %v1751, %v1791
    %v1793 = vpop.f32.mrb[0].mxu0
    %v1794 = vpop.f32.mrb[0].mxu0
    %1795 = vdwg.mxu0
    %1796 = vmatprep.subr.bf16.mxu0 %v1354
    %1797 = vmatpush1.bf16.msra.mxu0 %v1353
    %1798 = vmatprep.subr.bf16.mxu0 %v1358
    %1799 = vmatpush1.bf16.msra.mxu0 %v1357
    %1800 = vmatprep.subr.bf16.mxu0 %v1362
    %1801 = vmatpush1.bf16.msra.mxu0 %v1361
    %1802 = vmatprep.subr.bf16.mxu0 %v1366
    %1803 = vmatpush1.bf16.msra.mxu0 %v1365
    %1804 = vmatprep.subr.bf16.mxu0 %v1370
    %1805 = vmatpush1.bf16.msra.mxu0 %v1369
    %1806 = vmatprep.subr.bf16.mxu0 %v1374
    %1807 = vmatpush1.bf16.msra.mxu0 %v1373
    %1808 = vmatprep.subr.bf16.mxu0 %v1378
    %1809 = vmatpush1.bf16.msra.mxu0 %v1377
    %1810 = vmatprep.subr.bf16.mxu0 %v1382
    %1811 = vmatpush1.bf16.msra.mxu0 %v1381
    %1812 = vmatprep.subr.bf16.mxu0 %v1386
    %1813 = vmatpush1.bf16.msra.mxu0 %v1385
    %1814 = vmatprep.subr.bf16.mxu0 %v1390
    %1815 = vmatpush1.bf16.msra.mxu0 %v1389
    %1816 = vmatprep.subr.bf16.mxu0 %v1394
    %1817 = vmatpush1.bf16.msra.mxu0 %v1393
    %1818 = vmatprep.subr.bf16.mxu0 %v1398
    %1819 = vmatpush1.bf16.msra.mxu0 %v1397
    %1820 = vmatprep.subr.bf16.mxu0 %v1402
    %1821 = vmatpush1.bf16.msra.mxu0 %v1401
    %1822 = vmatprep.subr.bf16.mxu0 %v1406
    %1823 = vmatpush1.bf16.msra.mxu0 %v1405
    %1824 = vmatprep.subr.bf16.mxu0 %v1410
    %1825 = vmatpush1.bf16.msra.mxu0 %v1409
    %1826 = vmatprep.subr.bf16.mxu0 %v1414
    %1827 = vmatpush1.bf16.msra.mxu0 %v1413
    %1828 = vmatprep.mubr.bf16.mxu0 %v384
    %1829 = vmatmul.mubr.bf16.gmra.mrb[0].mxu0 %v383
    %v1830 = vpop.f32.mrb[0].mxu0
    %v1831 = vadd.f32 %v1790, %v1830
    %v1832 = vpop.f32.mrb[0].mxu0
    %v1833 = vadd.f32 %v1792, %v1832
    %v1834 = vpop.f32.mrb[0].mxu0
    %v1835 = vpop.f32.mrb[0].mxu0
    %1836 = vdwg.mxu0
    %1837 = vmatprep.subr.bf16.mxu0 %v1164
    %1838 = vmatpush1.bf16.msra.mxu0 %v1163
    %1839 = vmatprep.subr.bf16.mxu0 %v1168
    %1840 = vmatpush1.bf16.msra.mxu0 %v1167
    %1841 = vmatprep.subr.bf16.mxu0 %v1172
    %1842 = vmatpush1.bf16.msra.mxu0 %v1171
    %1843 = vmatprep.subr.bf16.mxu0 %v1176
    %1844 = vmatpush1.bf16.msra.mxu0 %v1175
    %1845 = vmatprep.subr.bf16.mxu0 %v1180
    %1846 = vmatpush1.bf16.msra.mxu0 %v1179
    %1847 = vmatprep.subr.bf16.mxu0 %v1184
    %1848 = vmatpush1.bf16.msra.mxu0 %v1183
    %1849 = vmatprep.subr.bf16.mxu0 %v1188
    %1850 = vmatpush1.bf16.msra.mxu0 %v1187
    %1851 = vmatprep.subr.bf16.mxu0 %v1192
    %1852 = vmatpush1.bf16.msra.mxu0 %v1191
    %1853 = vmatprep.subr.bf16.mxu0 %v1196
    %1854 = vmatpush1.bf16.msra.mxu0 %v1195
    %1855 = vmatprep.subr.bf16.mxu0 %v1200
    %1856 = vmatpush1.bf16.msra.mxu0 %v1199
    %1857 = vmatprep.subr.bf16.mxu0 %v1204
    %1858 = vmatpush1.bf16.msra.mxu0 %v1203
    %1859 = vmatprep.subr.bf16.mxu0 %v1208
    %1860 = vmatpush1.bf16.msra.mxu0 %v1207
    %1861 = vmatprep.subr.bf16.mxu0 %v1212
    %1862 = vmatpush1.bf16.msra.mxu0 %v1211
    %1863 = vmatprep.subr.bf16.mxu0 %v1216
    %1864 = vmatpush1.bf16.msra.mxu0 %v1215
    %1865 = vmatprep.subr.bf16.mxu0 %v1220
    %1866 = vmatpush1.bf16.msra.mxu0 %v1219
    %1867 = vmatprep.subr.bf16.mxu0 %v1224
    %1868 = vmatpush1.bf16.msra.mxu0 %v1223
    %1869 = vmatprep.mubr.bf16.mxu0 %v378
    %1870 = vmatmul.mubr.bf16.gmra.mrb[0].mxu0 %v377
    %v1871 = vpop.f32.mrb[0].mxu0
    %v1872 = vadd.f32 %v360, %v1871
    %v1873 = vpop.f32.mrb[0].mxu0
    %v1874 = vadd.f32 %v364, %v1873
    %v1875 = vpop.f32.mrb[0].mxu0
    %v1876 = vpop.f32.mrb[0].mxu0
    %1877 = vdwg.mxu0
    %1878 = vmatprep.subr.bf16.mxu0 %v1228
    %1879 = vmatpush1.bf16.msra.mxu0 %v1227
    %1880 = vmatprep.subr.bf16.mxu0 %v1232
    %1881 = vmatpush1.bf16.msra.mxu0 %v1231
    %1882 = vmatprep.subr.bf16.mxu0 %v1236
    %1883 = vmatpush1.bf16.msra.mxu0 %v1235
    %1884 = vmatprep.subr.bf16.mxu0 %v1240
    %1885 = vmatpush1.bf16.msra.mxu0 %v1239
    %1886 = vmatprep.subr.bf16.mxu0 %v1244
    %1887 = vmatpush1.bf16.msra.mxu0 %v1243
    %1888 = vmatprep.subr.bf16.mxu0 %v1248
    %1889 = vmatpush1.bf16.msra.mxu0 %v1247
    %1890 = vmatprep.subr.bf16.mxu0 %v1252
    %1891 = vmatpush1.bf16.msra.mxu0 %v1251
    %1892 = vmatprep.subr.bf16.mxu0 %v1256
    %1893 = vmatpush1.bf16.msra.mxu0 %v1255
    %1894 = vmatprep.subr.bf16.mxu0 %v1260
    %1895 = vmatpush1.bf16.msra.mxu0 %v1259
    %1896 = vmatprep.subr.bf16.mxu0 %v1264
    %1897 = vmatpush1.bf16.msra.mxu0 %v1263
    %1898 = vmatprep.subr.bf16.mxu0 %v1268
    %1899 = vmatpush1.bf16.msra.mxu0 %v1267
    %1900 = vmatprep.subr.bf16.mxu0 %v1272
    %1901 = vmatpush1.bf16.msra.mxu0 %v1271
    %1902 = vmatprep.subr.bf16.mxu0 %v1276
    %1903 = vmatpush1.bf16.msra.mxu0 %v1275
    %1904 = vmatprep.subr.bf16.mxu0 %v1280
    %1905 = vmatpush1.bf16.msra.mxu0 %v1279
    %1906 = vmatprep.subr.bf16.mxu0 %v1284
    %1907 = vmatpush1.bf16.msra.mxu0 %v1283
    %1908 = vmatprep.subr.bf16.mxu0 %v1288
    %1909 = vmatpush1.bf16.msra.mxu0 %v1287
    %1910 = vmatprep.mubr.bf16.mxu0 %v380
    %1911 = vmatmul.mubr.bf16.gmra.mrb[0].mxu0 %v379
    %v1912 = vpop.f32.mrb[0].mxu0
    %v1913 = vadd.f32 %v1872, %v1912
    %v1914 = vpop.f32.mrb[0].mxu0
    %v1915 = vadd.f32 %v1874, %v1914
    %v1916 = vpop.f32.mrb[0].mxu0
    %v1917 = vpop.f32.mrb[0].mxu0
    %1918 = vdwg.mxu0
    %1919 = vmatprep.subr.bf16.mxu0 %v1292
    %1920 = vmatpush1.bf16.msra.mxu0 %v1291
    %1921 = vmatprep.subr.bf16.mxu0 %v1296
    %1922 = vmatpush1.bf16.msra.mxu0 %v1295
    %1923 = vmatprep.subr.bf16.mxu0 %v1300
    %1924 = vmatpush1.bf16.msra.mxu0 %v1299
    %1925 = vmatprep.subr.bf16.mxu0 %v1304
    %1926 = vmatpush1.bf16.msra.mxu0 %v1303
    %1927 = vmatprep.subr.bf16.mxu0 %v1308
    %1928 = vmatpush1.bf16.msra.mxu0 %v1307
    %1929 = vmatprep.subr.bf16.mxu0 %v1312
    %1930 = vmatpush1.bf16.msra.mxu0 %v1311
    %1931 = vmatprep.subr.bf16.mxu0 %v1316
    %1932 = vmatpush1.bf16.msra.mxu0 %v1315
    %1933 = vmatprep.subr.bf16.mxu0 %v1320
    %1934 = vmatpush1.bf16.msra.mxu0 %v1319
    %1935 = vmatprep.subr.bf16.mxu0 %v1324
    %1936 = vmatpush1.bf16.msra.mxu0 %v1323
    %1937 = vmatprep.subr.bf16.mxu0 %v1328
    %1938 = vmatpush1.bf16.msra.mxu0 %v1327
    %1939 = vmatprep.subr.bf16.mxu0 %v1332
    %1940 = vmatpush1.bf16.msra.mxu0 %v1331
    %1941 = vmatprep.subr.bf16.mxu0 %v1336
    %1942 = vmatpush1.bf16.msra.mxu0 %v1335
    %1943 = vmatprep.subr.bf16.mxu0 %v1340
    %1944 = vmatpush1.bf16.msra.mxu0 %v1339
    %1945 = vmatprep.subr.bf16.mxu0 %v1344
    %1946 = vmatpush1.bf16.msra.mxu0 %v1343
    %1947 = vmatprep.subr.bf16.mxu0 %v1348
    %1948 = vmatpush1.bf16.msra.mxu0 %v1347
    %1949 = vmatprep.subr.bf16.mxu0 %v1352
    %1950 = vmatpush1.bf16.msra.mxu0 %v1351
    %1951 = vmatprep.mubr.bf16.mxu0 %v382
    %1952 = vmatmul.mubr.bf16.gmra.mrb[0].mxu0 %v381
    %v1953 = vpop.f32.mrb[0].mxu0
    %v1954 = vadd.f32 %v1913, %v1953
    %v1955 = vpop.f32.mrb[0].mxu0
    %v1956 = vadd.f32 %v1915, %v1955
    %v1957 = vpop.f32.mrb[0].mxu0
    %v1958 = vpop.f32.mrb[0].mxu0
    %1959 = vdwg.mxu0
    %1960 = vmatprep.subr.bf16.mxu0 %v1356
    %1961 = vmatpush1.bf16.msra.mxu0 %v1355
    %1962 = vmatprep.subr.bf16.mxu0 %v1360
    %1963 = vmatpush1.bf16.msra.mxu0 %v1359
    %1964 = vmatprep.subr.bf16.mxu0 %v1364
    %1965 = vmatpush1.bf16.msra.mxu0 %v1363
    %1966 = vmatprep.subr.bf16.mxu0 %v1368
    %1967 = vmatpush1.bf16.msra.mxu0 %v1367
    %1968 = vmatprep.subr.bf16.mxu0 %v1372
    %1969 = vmatpush1.bf16.msra.mxu0 %v1371
    %1970 = vmatprep.subr.bf16.mxu0 %v1376
    %1971 = vmatpush1.bf16.msra.mxu0 %v1375
    %1972 = vmatprep.subr.bf16.mxu0 %v1380
    %1973 = vmatpush1.bf16.msra.mxu0 %v1379
    %1974 = vmatprep.subr.bf16.mxu0 %v1384
    %1975 = vmatpush1.bf16.msra.mxu0 %v1383
    %1976 = vmatprep.subr.bf16.mxu0 %v1388
    %1977 = vmatpush1.bf16.msra.mxu0 %v1387
    %1978 = vmatprep.subr.bf16.mxu0 %v1392
    %1979 = vmatpush1.bf16.msra.mxu0 %v1391
    %1980 = vmatprep.subr.bf16.mxu0 %v1396
    %1981 = vmatpush1.bf16.msra.mxu0 %v1395
    %1982 = vmatprep.subr.bf16.mxu0 %v1400
    %1983 = vmatpush1.bf16.msra.mxu0 %v1399
    %1984 = vmatprep.subr.bf16.mxu0 %v1404
    %1985 = vmatpush1.bf16.msra.mxu0 %v1403
    %1986 = vmatprep.subr.bf16.mxu0 %v1408
    %1987 = vmatpush1.bf16.msra.mxu0 %v1407
    %1988 = vmatprep.subr.bf16.mxu0 %v1412
    %1989 = vmatpush1.bf16.msra.mxu0 %v1411
    %1990 = vmatprep.subr.bf16.mxu0 %v1416
    %1991 = vmatpush1.bf16.msra.mxu0 %v1415
    %1992 = vmatprep.mubr.bf16.mxu0 %v384
    %1993 = vmatmul.mubr.bf16.gmra.mrb[0].mxu0 %v383
    %v1994 = vpop.f32.mrb[0].mxu0
    %v1995 = vadd.f32 %v1954, %v1994
    %v1996 = vpop.f32.mrb[0].mxu0
    %v1997 = vadd.f32 %v1956, %v1996
    %v1998 = vpop.f32.mrb[0].mxu0
    %v1999 = vpop.f32.mrb[0].mxu0
    %2000 = vdwg.mxu0
    %v2001 = vmax.f32 %v1831, 0.0
    %v2002 = vmax.f32 %v1833, 0.0
    %v2003 = vmax.f32 %v1995, 0.0
    %v2004 = vmax.f32 %v1997, 0.0
    %v2005 = vpack.c.bf16 %v2001, %v2001
    %v2006 = vpack.c.bf16 %v2002, %v2002
    %v2007 = vpack.c.bf16 %v2003, %v2003
    %v2008 = vpack.c.bf16 %v2004, %v2004
    %v2009 = vld [vmem:[#allocation4] sm:$0xff]
    %v2010 = vld [vmem:[#allocation4 + $0x8] sm:$0xff]
    %v2011 = vld [vmem:[#allocation4 + $0x10] sm:$0xff]
    %v2012 = vld [vmem:[#allocation4 + $0x18] sm:$0xff]
    %v2013 = vld [vmem:[#allocation4 + $0x20] sm:$0xff]
    %v2014 = vld [vmem:[#allocation4 + $0x28] sm:$0xff]
    %v2015 = vld [vmem:[#allocation4 + $0x30] sm:$0xff]
    %v2016 = vld [vmem:[#allocation4 + $0x38] sm:$0xff]
    %v2017 = vld [vmem:[#allocation4 + $0x40] sm:$0xff]
    %v2018 = vld [vmem:[#allocation4 + $0x48] sm:$0xff]
    %v2019 = vld [vmem:[#allocation4 + $0x50] sm:$0xff]
    %v2020 = vld [vmem:[#allocation4 + $0x58] sm:$0xff]
    %v2021 = vld [vmem:[#allocation4 + $0x60] sm:$0xff]
    %v2022 = vld [vmem:[#allocation4 + $0x68] sm:$0xff]
    %v2023 = vld [vmem:[#allocation4 + $0x70] sm:$0xff]
    %v2024 = vld [vmem:[#allocation4 + $0x78] sm:$0xff]
    %v2025 = vld [vmem:[#allocation4 + $0x80] sm:$0xff]
    %v2026 = vld [vmem:[#allocation4 + $0x88] sm:$0xff]
    %v2027 = vld [vmem:[#allocation4 + $0x90] sm:$0xff]
    %v2028 = vld [vmem:[#allocation4 + $0x98] sm:$0xff]
    %v2029 = vld [vmem:[#allocation4 + $0xa0] sm:$0xff]
    %v2030 = vld [vmem:[#allocation4 + $0xa8] sm:$0xff]
    %v2031 = vld [vmem:[#allocation4 + $0xb0] sm:$0xff]
    %v2032 = vld [vmem:[#allocation4 + $0xb8] sm:$0xff]
    %v2033 = vld [vmem:[#allocation4 + $0xc0] sm:$0xff]
    %v2034 = vld [vmem:[#allocation4 + $0xc8] sm:$0xff]
    %v2035 = vld [vmem:[#allocation4 + $0xd0] sm:$0xff]
    %v2036 = vld [vmem:[#allocation4 + $0xd8] sm:$0xff]
    %v2037 = vld [vmem:[#allocation4 + $0xe0] sm:$0xff]
    %v2038 = vld [vmem:[#allocation4 + $0xe8] sm:$0xff]
    %v2039 = vld [vmem:[#allocation4 + $0xf0] sm:$0xff]
    %v2040 = vld [vmem:[#allocation4 + $0xf8] sm:$0xff]
    %v2041 = vld [vmem:[#allocation4 + $0x100] sm:$0xff]
    %v2042 = vld [vmem:[#allocation4 + $0x108] sm:$0xff]
    %v2043 = vld [vmem:[#allocation4 + $0x110] sm:$0xff]
    %v2044 = vld [vmem:[#allocation4 + $0x118] sm:$0xff]
    %v2045 = vld [vmem:[#allocation4 + $0x120] sm:$0xff]
    %v2046 = vld [vmem:[#allocation4 + $0x128] sm:$0xff]
    %v2047 = vld [vmem:[#allocation4 + $0x130] sm:$0xff]
    %v2048 = vld [vmem:[#allocation4 + $0x138] sm:$0xff]
    %v2049 = vld [vmem:[#allocation4 + $0x140] sm:$0xff]
    %v2050 = vld [vmem:[#allocation4 + $0x148] sm:$0xff]
    %v2051 = vld [vmem:[#allocation4 + $0x150] sm:$0xff]
    %v2052 = vld [vmem:[#allocation4 + $0x158] sm:$0xff]
    %v2053 = vld [vmem:[#allocation4 + $0x160] sm:$0xff]
    %v2054 = vld [vmem:[#allocation4 + $0x168] sm:$0xff]
    %v2055 = vld [vmem:[#allocation4 + $0x170] sm:$0xff]
    %v2056 = vld [vmem:[#allocation4 + $0x178] sm:$0xff]
    %v2057 = vld [vmem:[#allocation4 + $0x180] sm:$0xff]
    %v2058 = vld [vmem:[#allocation4 + $0x188] sm:$0xff]
    %v2059 = vld [vmem:[#allocation4 + $0x190] sm:$0xff]
    %v2060 = vld [vmem:[#allocation4 + $0x198] sm:$0xff]
    %v2061 = vld [vmem:[#allocation4 + $0x1a0] sm:$0xff]
    %v2062 = vld [vmem:[#allocation4 + $0x1a8] sm:$0xff]
    %v2063 = vld [vmem:[#allocation4 + $0x1b0] sm:$0xff]
    %v2064 = vld [vmem:[#allocation4 + $0x1b8] sm:$0xff]
    %v2065 = vld [vmem:[#allocation4 + $0x1c0] sm:$0xff]
    %v2066 = vld [vmem:[#allocation4 + $0x1c8] sm:$0xff]
    %v2067 = vld [vmem:[#allocation4 + $0x1d0] sm:$0xff]
    %v2068 = vld [vmem:[#allocation4 + $0x1d8] sm:$0xff]
    %v2069 = vld [vmem:[#allocation4 + $0x1e0] sm:$0xff]
    %v2070 = vld [vmem:[#allocation4 + $0x1e8] sm:$0xff]
    %v2071 = vld [vmem:[#allocation4 + $0x1f0] sm:$0xff]
    %v2072 = vld [vmem:[#allocation4 + $0x1f8] sm:$0xff]
    %v2073 = vlaneseq
    %v2074 = vshrl.u32 %v2073, 7
    %v2075 = vsub.s32 1, %v2074
    %v2076 = vrot.slane %v69, %v2075
    %v2077 = vlaneseq
    %v2078 = vshrl.u32 %v2077, 7
    %v2079 = vsub.s32 5, %v2078
    %v2080 = vrot.slane %v69, %v2079
    %v2083 = vlaneseq
    %v2084 = vshrl.u32 %v2083, 7
    %v2085 = vsub.s32 1, %v2084
    %v2086 = vrot.slane %v2076, %v2085
    %v2087 = vlaneseq
    %v2088 = vshrl.u32 %v2087, 7
    %v2089 = vsub.s32 1, %v2088
    %v2090 = vrot.slane %v2080, %v2089
    %v2155 = vunpack.c.l.b16 %v2009
    %v2156 = vunpack.c.h.b16 %v2009
    %v2157 = vunpack.c.l.b16 %v2010
    %v2158 = vunpack.c.h.b16 %v2010
    %v2159 = vunpack.c.l.b16 %v2011
    %v2160 = vunpack.c.h.b16 %v2011
    %v2161 = vunpack.c.l.b16 %v2012
    %v2162 = vunpack.c.h.b16 %v2012
    %v2163 = vunpack.c.l.b16 %v2013
    %v2164 = vunpack.c.h.b16 %v2013
    %v2165 = vunpack.c.l.b16 %v2014
    %v2166 = vunpack.c.h.b16 %v2014
    %v2167 = vunpack.c.l.b16 %v2015
    %v2168 = vunpack.c.h.b16 %v2015
    %v2169 = vunpack.c.l.b16 %v2016
    %v2170 = vunpack.c.h.b16 %v2016
    %v2171 = vunpack.c.l.b16 %v2017
    %v2172 = vunpack.c.h.b16 %v2017
    %v2173 = vunpack.c.l.b16 %v2018
    %v2174 = vunpack.c.h.b16 %v2018
    %v2175 = vunpack.c.l.b16 %v2019
    %v2176 = vunpack.c.h.b16 %v2019
    %v2177 = vunpack.c.l.b16 %v2020
    %v2178 = vunpack.c.h.b16 %v2020
    %v2179 = vunpack.c.l.b16 %v2021
    %v2180 = vunpack.c.h.b16 %v2021
    %v2181 = vunpack.c.l.b16 %v2022
    %v2182 = vunpack.c.h.b16 %v2022
    %v2183 = vunpack.c.l.b16 %v2023
    %v2184 = vunpack.c.h.b16 %v2023
    %v2185 = vunpack.c.l.b16 %v2024
    %v2186 = vunpack.c.h.b16 %v2024
    %v2187 = vunpack.c.l.b16 %v2025
    %v2188 = vunpack.c.h.b16 %v2025
    %v2189 = vunpack.c.l.b16 %v2026
    %v2190 = vunpack.c.h.b16 %v2026
    %v2191 = vunpack.c.l.b16 %v2027
    %v2192 = vunpack.c.h.b16 %v2027
    %v2193 = vunpack.c.l.b16 %v2028
    %v2194 = vunpack.c.h.b16 %v2028
    %v2195 = vunpack.c.l.b16 %v2029
    %v2196 = vunpack.c.h.b16 %v2029
    %v2197 = vunpack.c.l.b16 %v2030
    %v2198 = vunpack.c.h.b16 %v2030
    %v2199 = vunpack.c.l.b16 %v2031
    %v2200 = vunpack.c.h.b16 %v2031
    %v2201 = vunpack.c.l.b16 %v2032
    %v2202 = vunpack.c.h.b16 %v2032
    %v2203 = vunpack.c.l.b16 %v2033
    %v2204 = vunpack.c.h.b16 %v2033
    %v2205 = vunpack.c.l.b16 %v2034
    %v2206 = vunpack.c.h.b16 %v2034
    %v2207 = vunpack.c.l.b16 %v2035
    %v2208 = vunpack.c.h.b16 %v2035
    %v2209 = vunpack.c.l.b16 %v2036
    %v2210 = vunpack.c.h.b16 %v2036
    %v2211 = vunpack.c.l.b16 %v2037
    %v2212 = vunpack.c.h.b16 %v2037
    %v2213 = vunpack.c.l.b16 %v2038
    %v2214 = vunpack.c.h.b16 %v2038
    %v2215 = vunpack.c.l.b16 %v2039
    %v2216 = vunpack.c.h.b16 %v2039
    %v2217 = vunpack.c.l.b16 %v2040
    %v2218 = vunpack.c.h.b16 %v2040
    %v2219 = vunpack.c.l.b16 %v2041
    %v2220 = vunpack.c.h.b16 %v2041
    %v2221 = vunpack.c.l.b16 %v2042
    %v2222 = vunpack.c.h.b16 %v2042
    %v2223 = vunpack.c.l.b16 %v2043
    %v2224 = vunpack.c.h.b16 %v2043
    %v2225 = vunpack.c.l.b16 %v2044
    %v2226 = vunpack.c.h.b16 %v2044
    %v2227 = vunpack.c.l.b16 %v2045
    %v2228 = vunpack.c.h.b16 %v2045
    %v2229 = vunpack.c.l.b16 %v2046
    %v2230 = vunpack.c.h.b16 %v2046
    %v2231 = vunpack.c.l.b16 %v2047
    %v2232 = vunpack.c.h.b16 %v2047
    %v2233 = vunpack.c.l.b16 %v2048
    %v2234 = vunpack.c.h.b16 %v2048
    %v2235 = vunpack.c.l.b16 %v2049
    %v2236 = vunpack.c.h.b16 %v2049
    %v2237 = vunpack.c.l.b16 %v2050
    %v2238 = vunpack.c.h.b16 %v2050
    %v2239 = vunpack.c.l.b16 %v2051
    %v2240 = vunpack.c.h.b16 %v2051
    %v2241 = vunpack.c.l.b16 %v2052
    %v2242 = vunpack.c.h.b16 %v2052
    %v2243 = vunpack.c.l.b16 %v2053
    %v2244 = vunpack.c.h.b16 %v2053
    %v2245 = vunpack.c.l.b16 %v2054
    %v2246 = vunpack.c.h.b16 %v2054
    %v2247 = vunpack.c.l.b16 %v2055
    %v2248 = vunpack.c.h.b16 %v2055
    %v2249 = vunpack.c.l.b16 %v2056
    %v2250 = vunpack.c.h.b16 %v2056
    %v2251 = vunpack.c.l.b16 %v2057
    %v2252 = vunpack.c.h.b16 %v2057
    %v2253 = vunpack.c.l.b16 %v2058
    %v2254 = vunpack.c.h.b16 %v2058
    %v2255 = vunpack.c.l.b16 %v2059
    %v2256 = vunpack.c.h.b16 %v2059
    %v2257 = vunpack.c.l.b16 %v2060
    %v2258 = vunpack.c.h.b16 %v2060
    %v2259 = vunpack.c.l.b16 %v2061
    %v2260 = vunpack.c.h.b16 %v2061
    %v2261 = vunpack.c.l.b16 %v2062
    %v2262 = vunpack.c.h.b16 %v2062
    %v2263 = vunpack.c.l.b16 %v2063
    %v2264 = vunpack.c.h.b16 %v2063
    %v2265 = vunpack.c.l.b16 %v2064
    %v2266 = vunpack.c.h.b16 %v2064
    %v2267 = vunpack.c.l.b16 %v2065
    %v2268 = vunpack.c.h.b16 %v2065
    %v2269 = vunpack.c.l.b16 %v2066
    %v2270 = vunpack.c.h.b16 %v2066
    %v2271 = vunpack.c.l.b16 %v2067
    %v2272 = vunpack.c.h.b16 %v2067
    %v2273 = vunpack.c.l.b16 %v2068
    %v2274 = vunpack.c.h.b16 %v2068
    %v2275 = vunpack.c.l.b16 %v2069
    %v2276 = vunpack.c.h.b16 %v2069
    %v2277 = vunpack.c.l.b16 %v2070
    %v2278 = vunpack.c.h.b16 %v2070
    %v2279 = vunpack.c.l.b16 %v2071
    %v2280 = vunpack.c.h.b16 %v2071
    %v2281 = vunpack.c.l.b16 %v2072
    %v2282 = vunpack.c.h.b16 %v2072
    %v2283 = vpack.c.b16 %v2157, %v2155
    %v2284 = vpack.c.b16 %v2158, %v2156
    %v2285 = vpack.c.b16 %v2161, %v2159
    %v2286 = vpack.c.b16 %v2162, %v2160
    %v2287 = vpack.c.b16 %v2165, %v2163
    %v2288 = vpack.c.b16 %v2166, %v2164
    %v2289 = vpack.c.b16 %v2169, %v2167
    %v2290 = vpack.c.b16 %v2170, %v2168
    %v2291 = vpack.c.b16 %v2173, %v2171
    %v2292 = vpack.c.b16 %v2174, %v2172
    %v2293 = vpack.c.b16 %v2177, %v2175
    %v2294 = vpack.c.b16 %v2178, %v2176
    %v2295 = vpack.c.b16 %v2181, %v2179
    %v2296 = vpack.c.b16 %v2182, %v2180
    %v2297 = vpack.c.b16 %v2185, %v2183
    %v2298 = vpack.c.b16 %v2186, %v2184
    %v2299 = vpack.c.b16 %v2189, %v2187
    %v2300 = vpack.c.b16 %v2190, %v2188
    %v2301 = vpack.c.b16 %v2193, %v2191
    %v2302 = vpack.c.b16 %v2194, %v2192
    %v2303 = vpack.c.b16 %v2197, %v2195
    %v2304 = vpack.c.b16 %v2198, %v2196
    %v2305 = vpack.c.b16 %v2201, %v2199
    %v2306 = vpack.c.b16 %v2202, %v2200
    %v2307 = vpack.c.b16 %v2205, %v2203
    %v2308 = vpack.c.b16 %v2206, %v2204
    %v2309 = vpack.c.b16 %v2209, %v2207
    %v2310 = vpack.c.b16 %v2210, %v2208
    %v2311 = vpack.c.b16 %v2213, %v2211
    %v2312 = vpack.c.b16 %v2214, %v2212
    %v2313 = vpack.c.b16 %v2217, %v2215
    %v2314 = vpack.c.b16 %v2218, %v2216
    %v2315 = vpack.c.b16 %v2221, %v2219
    %v2316 = vpack.c.b16 %v2222, %v2220
    %v2317 = vpack.c.b16 %v2225, %v2223
    %v2318 = vpack.c.b16 %v2226, %v2224
    %v2319 = vpack.c.b16 %v2229, %v2227
    %v2320 = vpack.c.b16 %v2230, %v2228
    %v2321 = vpack.c.b16 %v2233, %v2231
    %v2322 = vpack.c.b16 %v2234, %v2232
    %v2323 = vpack.c.b16 %v2237, %v2235
    %v2324 = vpack.c.b16 %v2238, %v2236
    %v2325 = vpack.c.b16 %v2241, %v2239
    %v2326 = vpack.c.b16 %v2242, %v2240
    %v2327 = vpack.c.b16 %v2245, %v2243
    %v2328 = vpack.c.b16 %v2246, %v2244
    %v2329 = vpack.c.b16 %v2249, %v2247
    %v2330 = vpack.c.b16 %v2250, %v2248
    %v2331 = vpack.c.b16 %v2253, %v2251
    %v2332 = vpack.c.b16 %v2254, %v2252
    %v2333 = vpack.c.b16 %v2257, %v2255
    %v2334 = vpack.c.b16 %v2258, %v2256
    %v2335 = vpack.c.b16 %v2261, %v2259
    %v2336 = vpack.c.b16 %v2262, %v2260
    %v2337 = vpack.c.b16 %v2265, %v2263
    %v2338 = vpack.c.b16 %v2266, %v2264
    %v2339 = vpack.c.b16 %v2269, %v2267
    %v2340 = vpack.c.b16 %v2270, %v2268
    %v2341 = vpack.c.b16 %v2273, %v2271
    %v2342 = vpack.c.b16 %v2274, %v2272
    %v2343 = vpack.c.b16 %v2277, %v2275
    %v2344 = vpack.c.b16 %v2278, %v2276
    %v2345 = vpack.c.b16 %v2281, %v2279
    %v2346 = vpack.c.b16 %v2282, %v2280
    %2411 = vmatprep.subr.bf16.mxu0 %v2284
    %2412 = vmatpush1.bf16.msra.mxu0 %v2283
    %2413 = vmatprep.subr.bf16.mxu0 %v2286
    %2414 = vmatpush1.bf16.msra.mxu0 %v2285
    %2415 = vmatprep.subr.bf16.mxu0 %v2288
    %2416 = vmatpush1.bf16.msra.mxu0 %v2287
    %2417 = vmatprep.subr.bf16.mxu0 %v2290
    %2418 = vmatpush1.bf16.msra.mxu0 %v2289
    %2419 = vmatprep.subr.bf16.mxu0 %v2292
    %2420 = vmatpush1.bf16.msra.mxu0 %v2291
    %2421 = vmatprep.subr.bf16.mxu0 %v2294
    %2422 = vmatpush1.bf16.msra.mxu0 %v2293
    %2423 = vmatprep.subr.bf16.mxu0 %v2296
    %2424 = vmatpush1.bf16.msra.mxu0 %v2295
    %2425 = vmatprep.subr.bf16.mxu0 %v2298
    %2426 = vmatpush1.bf16.msra.mxu0 %v2297
    %2427 = vmatprep.subr.bf16.mxu0 %v2300
    %2428 = vmatpush1.bf16.msra.mxu0 %v2299
    %2429 = vmatprep.subr.bf16.mxu0 %v2302
    %2430 = vmatpush1.bf16.msra.mxu0 %v2301
    %2431 = vmatprep.subr.bf16.mxu0 %v2304
    %2432 = vmatpush1.bf16.msra.mxu0 %v2303
    %2433 = vmatprep.subr.bf16.mxu0 %v2306
    %2434 = vmatpush1.bf16.msra.mxu0 %v2305
    %2435 = vmatprep.subr.bf16.mxu0 %v2308
    %2436 = vmatpush1.bf16.msra.mxu0 %v2307
    %2437 = vmatprep.subr.bf16.mxu0 %v2310
    %2438 = vmatpush1.bf16.msra.mxu0 %v2309
    %2439 = vmatprep.subr.bf16.mxu0 %v2312
    %2440 = vmatpush1.bf16.msra.mxu0 %v2311
    %2441 = vmatprep.subr.bf16.mxu0 %v2314
    %2442 = vmatpush1.bf16.msra.mxu0 %v2313
    %2443 = vmatprep.mubr.bf16.mxu0 %v2006
    %2444 = vmatmul.mubr.bf16.gmra.mrb[0].mxu0 %v2005
    %v2445 = vpop.f32.mrb[0].mxu0
    %v2446 = vadd.f32 %v2086, %v2445
    %v2447 = vpop.f32.mrb[0].mxu0
    %v2448 = vadd.f32 %v2090, %v2447
    %v2449 = vpop.f32.mrb[0].mxu0
    %v2450 = vpop.f32.mrb[0].mxu0
    %2451 = vdwg.mxu0
    %2452 = vmatprep.subr.bf16.mxu0 %v2316
    %2453 = vmatpush1.bf16.msra.mxu0 %v2315
    %2454 = vmatprep.subr.bf16.mxu0 %v2318
    %2455 = vmatpush1.bf16.msra.mxu0 %v2317
    %2456 = vmatprep.subr.bf16.mxu0 %v2320
    %2457 = vmatpush1.bf16.msra.mxu0 %v2319
    %2458 = vmatprep.subr.bf16.mxu0 %v2322
    %2459 = vmatpush1.bf16.msra.mxu0 %v2321
    %2460 = vmatprep.subr.bf16.mxu0 %v2324
    %2461 = vmatpush1.bf16.msra.mxu0 %v2323
    %2462 = vmatprep.subr.bf16.mxu0 %v2326
    %2463 = vmatpush1.bf16.msra.mxu0 %v2325
    %2464 = vmatprep.subr.bf16.mxu0 %v2328
    %2465 = vmatpush1.bf16.msra.mxu0 %v2327
    %2466 = vmatprep.subr.bf16.mxu0 %v2330
    %2467 = vmatpush1.bf16.msra.mxu0 %v2329
    %2468 = vmatprep.subr.bf16.mxu0 %v2332
    %2469 = vmatpush1.bf16.msra.mxu0 %v2331
    %2470 = vmatprep.subr.bf16.mxu0 %v2334
    %2471 = vmatpush1.bf16.msra.mxu0 %v2333
    %2472 = vmatprep.subr.bf16.mxu0 %v2336
    %2473 = vmatpush1.bf16.msra.mxu0 %v2335
    %2474 = vmatprep.subr.bf16.mxu0 %v2338
    %2475 = vmatpush1.bf16.msra.mxu0 %v2337
    %2476 = vmatprep.subr.bf16.mxu0 %v2340
    %2477 = vmatpush1.bf16.msra.mxu0 %v2339
    %2478 = vmatprep.subr.bf16.mxu0 %v2342
    %2479 = vmatpush1.bf16.msra.mxu0 %v2341
    %2480 = vmatprep.subr.bf16.mxu0 %v2344
    %2481 = vmatpush1.bf16.msra.mxu0 %v2343
    %2482 = vmatprep.subr.bf16.mxu0 %v2346
    %2483 = vmatpush1.bf16.msra.mxu0 %v2345
    %2484 = vmatprep.mubr.bf16.mxu0 %v2008
    %2485 = vmatmul.mubr.bf16.gmra.mrb[0].mxu0 %v2007
    %v2486 = vpop.f32.mrb[0].mxu0
    %v2487 = vadd.f32 %v2446, %v2486
    %v2488 = vpop.f32.mrb[0].mxu0
    %v2489 = vadd.f32 %v2448, %v2488
    %v2490 = vpop.f32.mrb[0].mxu0
    %v2491 = vpop.f32.mrb[0].mxu0
    %2492 = vdwg.mxu0
    %v2493 = vmax.f32 %v2487, 0.0
    %v2494 = vmax.f32 %v2489, 0.0
    %v2495 = vpack.c.bf16 %v2493, %v2493
    %v2496 = vpack.c.bf16 %v2494, %v2494
    %v2497 = vld [vmem:[%s3] sm:$0xf]
    %v2498 = vld [vmem:[%s3 + $0x4] sm:$0xf]
    %v2499 = vld [vmem:[%s3 + $0x8] sm:$0xf]
    %v2500 = vld [vmem:[%s3 + $0xc] sm:$0xf]
    %v2501 = vld [vmem:[%s3 + $0x10] sm:$0xf]
    %v2502 = vld [vmem:[%s3 + $0x14] sm:$0xf]
    %v2503 = vld [vmem:[%s3 + $0x18] sm:$0xf]
    %v2504 = vld [vmem:[%s3 + $0x1c] sm:$0xf]
    %v2505 = vld [vmem:[%s3 + $0x20] sm:$0xf]
    %v2506 = vld [vmem:[%s3 + $0x24] sm:$0xf]
    %v2507 = vld [vmem:[%s3 + $0x28] sm:$0xf]
    %v2508 = vld [vmem:[%s3 + $0x2c] sm:$0xf]
    %v2509 = vld [vmem:[%s3 + $0x30] sm:$0xf]
    %v2510 = vld [vmem:[%s3 + $0x34] sm:$0xf]
    %v2511 = vld [vmem:[%s3 + $0x38] sm:$0xf]
    %v2512 = vld [vmem:[%s3 + $0x3c] sm:$0xf]
    %v2513 = vld [vmem:[%s3 + $0x40] sm:$0xf]
    %v2514 = vld [vmem:[%s3 + $0x44] sm:$0xf]
    %v2515 = vld [vmem:[%s3 + $0x48] sm:$0xf]
    %v2516 = vld [vmem:[%s3 + $0x4c] sm:$0xf]
    %v2517 = vld [vmem:[%s3 + $0x50] sm:$0xf]
    %v2518 = vld [vmem:[%s3 + $0x54] sm:$0xf]
    %v2519 = vld [vmem:[%s3 + $0x58] sm:$0xf]
    %v2520 = vld [vmem:[%s3 + $0x5c] sm:$0xf]
    %v2521 = vld [vmem:[%s3 + $0x60] sm:$0xf]
    %v2522 = vld [vmem:[%s3 + $0x64] sm:$0xf]
    %v2523 = vld [vmem:[%s3 + $0x68] sm:$0xf]
    %v2524 = vld [vmem:[%s3 + $0x6c] sm:$0xf]
    %v2525 = vld [vmem:[%s3 + $0x70] sm:$0xf]
    %v2526 = vld [vmem:[%s3 + $0x74] sm:$0xf]
    %v2527 = vld [vmem:[%s3 + $0x78] sm:$0xf]
    %v2528 = vld [vmem:[%s3 + $0x7c] sm:$0xf]
    %v2529 = vlaneseq
    %v2530 = vshrl.u32 %v2529, 7
    %v2531 = vsub.s32 2, %v2530
    %v2532 = vrot.slane %v69, %v2531
    %v2565 = vunpack.c.l.b16 %v2497
    %v2566 = vunpack.c.l.b16 %v2498
    %v2567 = vunpack.c.l.b16 %v2499
    %v2568 = vunpack.c.l.b16 %v2500
    %v2569 = vunpack.c.l.b16 %v2501
    %v2570 = vunpack.c.l.b16 %v2502
    %v2571 = vunpack.c.l.b16 %v2503
    %v2572 = vunpack.c.l.b16 %v2504
    %v2573 = vunpack.c.l.b16 %v2505
    %v2574 = vunpack.c.l.b16 %v2506
    %v2575 = vunpack.c.l.b16 %v2507
    %v2576 = vunpack.c.l.b16 %v2508
    %v2577 = vunpack.c.l.b16 %v2509
    %v2578 = vunpack.c.l.b16 %v2510
    %v2579 = vunpack.c.l.b16 %v2511
    %v2580 = vunpack.c.l.b16 %v2512
    %v2581 = vunpack.c.l.b16 %v2513
    %v2582 = vunpack.c.l.b16 %v2514
    %v2583 = vunpack.c.l.b16 %v2515
    %v2584 = vunpack.c.l.b16 %v2516
    %v2585 = vunpack.c.l.b16 %v2517
    %v2586 = vunpack.c.l.b16 %v2518
    %v2587 = vunpack.c.l.b16 %v2519
    %v2588 = vunpack.c.l.b16 %v2520
    %v2589 = vunpack.c.l.b16 %v2521
    %v2590 = vunpack.c.l.b16 %v2522
    %v2591 = vunpack.c.l.b16 %v2523
    %v2592 = vunpack.c.l.b16 %v2524
    %v2593 = vunpack.c.l.b16 %v2525
    %v2594 = vunpack.c.l.b16 %v2526
    %v2595 = vunpack.c.l.b16 %v2527
    %v2596 = vunpack.c.l.b16 %v2528
    %v2597 = vpack.c.b16 %v2566, %v2565
    %v2598 = vpack.c.b16 %v2568, %v2567
    %v2599 = vpack.c.b16 %v2570, %v2569
    %v2600 = vpack.c.b16 %v2572, %v2571
    %v2601 = vpack.c.b16 %v2574, %v2573
    %v2602 = vpack.c.b16 %v2576, %v2575
    %v2603 = vpack.c.b16 %v2578, %v2577
    %v2604 = vpack.c.b16 %v2580, %v2579
    %v2605 = vpack.c.b16 %v2582, %v2581
    %v2606 = vpack.c.b16 %v2584, %v2583
    %v2607 = vpack.c.b16 %v2586, %v2585
    %v2608 = vpack.c.b16 %v2588, %v2587
    %v2609 = vpack.c.b16 %v2590, %v2589
    %v2610 = vpack.c.b16 %v2592, %v2591
    %v2611 = vpack.c.b16 %v2594, %v2593
    %v2612 = vpack.c.b16 %v2596, %v2595
    %2629 = vmatprep.subr.bf16.mxu0 0
    %2630 = vmatpush1.bf16.msra.mxu0 %v2597
    %2631 = vmatprep.subr.bf16.mxu0 0
    %2632 = vmatpush1.bf16.msra.mxu0 %v2598
    %2633 = vmatprep.subr.bf16.mxu0 0
    %2634 = vmatpush1.bf16.msra.mxu0 %v2599
    %2635 = vmatprep.subr.bf16.mxu0 0
    %2636 = vmatpush1.bf16.msra.mxu0 %v2600
    %2637 = vmatprep.subr.bf16.mxu0 0
    %2638 = vmatpush1.bf16.msra.mxu0 %v2601
    %2639 = vmatprep.subr.bf16.mxu0 0
    %2640 = vmatpush1.bf16.msra.mxu0 %v2602
    %2641 = vmatprep.subr.bf16.mxu0 0
    %2642 = vmatpush1.bf16.msra.mxu0 %v2603
    %2643 = vmatprep.subr.bf16.mxu0 0
    %2644 = vmatpush1.bf16.msra.mxu0 %v2604
    %2645 = vmatprep.subr.bf16.mxu0 0
    %2646 = vmatpush1.bf16.msra.mxu0 %v2605
    %2647 = vmatprep.subr.bf16.mxu0 0
    %2648 = vmatpush1.bf16.msra.mxu0 %v2606
    %2649 = vmatprep.subr.bf16.mxu0 0
    %2650 = vmatpush1.bf16.msra.mxu0 %v2607
    %2651 = vmatprep.subr.bf16.mxu0 0
    %2652 = vmatpush1.bf16.msra.mxu0 %v2608
    %2653 = vmatprep.subr.bf16.mxu0 0
    %2654 = vmatpush1.bf16.msra.mxu0 %v2609
    %2655 = vmatprep.subr.bf16.mxu0 0
    %2656 = vmatpush1.bf16.msra.mxu0 %v2610
    %2657 = vmatprep.subr.bf16.mxu0 0
    %2658 = vmatpush1.bf16.msra.mxu0 %v2611
    %2659 = vmatprep.subr.bf16.mxu0 0
    %2660 = vmatpush1.bf16.msra.mxu0 %v2612
    %2661 = vmatprep.mubr.bf16.mxu0 %v2496
    %2662 = vmatmul.mubr.bf16.gmra.mrb[0].mxu0 %v2495
    %v2663 = vpop.f32.mrb[0].mxu0
    %v2664 = vadd.f32 %v2532, %v2663
    %v2665 = vpop.f32.mrb[0].mxu0
    %v2666 = vpop.f32.mrb[0].mxu0
    %v2667 = vpop.f32.mrb[0].mxu0
    %2668 = vdwg.mxu0
    %v2669 = vmax.f32 %v2664, 0.0
    %v2670 = vpack.c.bf16 %v2669, %v2669
    %v2671 = vld [vmem:[#allocation6] sm:$0xf]
    %v2672 = vld [vmem:[#allocation6 + $0x4] sm:$0xf]
    %v2673 = vld [vmem:[#allocation6 + $0x8] sm:$0xf]
    %v2674 = vld [vmem:[#allocation6 + $0xc] sm:$0xf]
    %v2675 = vld [vmem:[#allocation6 + $0x10] sm:$0xf]
    %v2676 = vld [vmem:[#allocation6 + $0x14] sm:$0xf]
    %v2677 = vld [vmem:[#allocation6 + $0x18] sm:$0xf]
    %v2678 = vld [vmem:[#allocation6 + $0x1c] sm:$0xf]
    %v2679 = vld [vmem:[#allocation6 + $0x20] sm:$0xf]
    %v2680 = vld [vmem:[#allocation6 + $0x24] sm:$0xf]
    %v2681 = vld [vmem:[#allocation6 + $0x28] sm:$0xf]
    %v2682 = vld [vmem:[#allocation6 + $0x2c] sm:$0xf]
    %v2683 = vld [vmem:[#allocation6 + $0x30] sm:$0xf]
    %v2684 = vld [vmem:[#allocation6 + $0x34] sm:$0xf]
    %v2685 = vld [vmem:[#allocation6 + $0x38] sm:$0xf]
    %v2686 = vld [vmem:[#allocation6 + $0x3c] sm:$0xf]
    %v2687 = vlaneseq
    %v2688 = vshrl.u32 %v2687, 7
    %v2689 = vsub.s32 3, %v2688
    %v2690 = vrot.slane %v69, %v2689
    %v2707 = vunpack.c.l.b16 %v2671
    %v2708 = vunpack.c.l.b16 %v2672
    %v2709 = vunpack.c.l.b16 %v2673
    %v2710 = vunpack.c.l.b16 %v2674
    %v2711 = vunpack.c.l.b16 %v2675
    %v2712 = vunpack.c.l.b16 %v2676
    %v2713 = vunpack.c.l.b16 %v2677
    %v2714 = vunpack.c.l.b16 %v2678
    %v2715 = vunpack.c.l.b16 %v2679
    %v2716 = vunpack.c.l.b16 %v2680
    %v2717 = vunpack.c.l.b16 %v2681
    %v2718 = vunpack.c.l.b16 %v2682
    %v2719 = vunpack.c.l.b16 %v2683
    %v2720 = vunpack.c.l.b16 %v2684
    %v2721 = vunpack.c.l.b16 %v2685
    %v2722 = vunpack.c.l.b16 %v2686
    %v2723 = vpack.c.b16 %v2708, %v2707
    %v2724 = vpack.c.b16 %v2710, %v2709
    %v2725 = vpack.c.b16 %v2712, %v2711
    %v2726 = vpack.c.b16 %v2714, %v2713
    %v2727 = vpack.c.b16 %v2716, %v2715
    %v2728 = vpack.c.b16 %v2718, %v2717
    %v2729 = vpack.c.b16 %v2720, %v2719
    %v2730 = vpack.c.b16 %v2722, %v2721
    %2739 = vmatprep.subr.bf16.mxu0 0
    %2740 = vmatpush1.bf16.msra.mxu0 %v2723
    %2741 = vmatprep.subr.bf16.mxu0 0
    %2742 = vmatpush1.bf16.msra.mxu0 %v2724
    %2743 = vmatprep.subr.bf16.mxu0 0
    %2744 = vmatpush1.bf16.msra.mxu0 %v2725
    %2745 = vmatprep.subr.bf16.mxu0 0
    %2746 = vmatpush1.bf16.msra.mxu0 %v2726
    %2747 = vmatprep.subr.bf16.mxu0 0
    %2748 = vmatpush1.bf16.msra.mxu0 %v2727
    %2749 = vmatprep.subr.bf16.mxu0 0
    %2750 = vmatpush1.bf16.msra.mxu0 %v2728
    %2751 = vmatprep.subr.bf16.mxu0 0
    %2752 = vmatpush1.bf16.msra.mxu0 %v2729
    %2753 = vmatprep.subr.bf16.mxu0 0
    %2754 = vmatpush1.bf16.msra.mxu0 %v2730
    %2755 = vmatprep.subr.bf16.mxu0 0
    %2756 = vmatpush1.bf16.msra.mxu0 0
    %2757 = vmatprep.subr.bf16.mxu0 0
    %2758 = vmatpush1.bf16.msra.mxu0 0
    %2759 = vmatprep.subr.bf16.mxu0 0
    %2760 = vmatpush1.bf16.msra.mxu0 0
    %2761 = vmatprep.subr.bf16.mxu0 0
    %2762 = vmatpush1.bf16.msra.mxu0 0
    %2763 = vmatprep.subr.bf16.mxu0 0
    %2764 = vmatpush1.bf16.msra.mxu0 0
    %2765 = vmatprep.subr.bf16.mxu0 0
    %2766 = vmatpush1.bf16.msra.mxu0 0
    %2767 = vmatprep.subr.bf16.mxu0 0
    %2768 = vmatpush1.bf16.msra.mxu0 0
    %2769 = vmatprep.subr.bf16.mxu0 0
    %2770 = vmatpush1.bf16.msra.mxu0 0
    %2771 = vmatprep.mubr.bf16.mxu0 0
    %2772 = vmatmul.mubr.bf16.gmra.mrb[0].mxu0 %v2670
    %v2773 = vpop.f32.mrb[0].mxu0
    %v2774 = vadd.f32 %v2690, %v2773
    %v2775 = vpop.f32.mrb[0].mxu0
    %v2776 = vpop.f32.mrb[0].mxu0
    %v2777 = vpop.f32.mrb[0].mxu0
    %2778 = vdwg.mxu0
    %v2779 = vlaneseq
    %v2780 = vand.u32 %v2779, 127
    %vm2781 = vcmp.lt.s32.totalorder %v2780, 4
    %v2782 = vsel %vm2781, %v2774, -1e+30
    %2783 = vmax.xlane.f32.xlu0 %v2782
    %v2784 = vpop.xlane.xlu0 %2783
    %v2785 = vsub.f32 %v2782, %v2784
    %v2786 = vmul.f32 %v2785, 1.442695
    %v2787 = vpow.pop %v2786
    %2788 = vadd.xlane.f32.xlu0 %v2787
    %v2789 = vpop.xlane.xlu0 %2788
    %v2790 = vrcp.pop %v2789
    %v2791 = vmul.f32 %v2787, %v2790
    %v2792 = vsub.f32 %v2774, %v2784
    %v2793 = vlog2.pop %v2789
    %v2794 = vmul.f32 %v2793, 0.6931472
    %v2795 = vsub.f32 %v2792, %v2794
    %v2796 = vsel %vm2781, %v2795, 0.0
    %vm2797 = vcmp.eq.s32.totalorder %v2780, 4
    %v2798 = vsel %vm2797, %v2774, %v2791
    %2799 = vst [vmem:[%s6] sm:$0xff] %v2798
    %s2800 = scalar_lea.vmem %s6, 8
    %2801 = vst [vmem:[%s2800] sm:$0xff] %v2796
    // Predicated region
    $region38: #{actor_critic_forward.1} parent=1 // pred_check
      _
    $region39: #{actor_critic_forward.1} parent=1 // pred_check_branch
      %2803 = sbr.rel (0) target = $region41
    $region40: #{actor_critic_forward.1} parent=1 // pred_region
      _
    $region41: #{actor_critic_forward.1} parent=1 // pred_fallthru
      _
    // Predicated region
    $region42: #{actor_critic_forward.1} parent=1 // pred_check
      _
    $region43: #{actor_critic_forward.1} parent=1 // pred_check_branch
      %2805 = sbr.rel (0) target = $region45
    $region44: #{actor_critic_forward.1} parent=1 // pred_region
      _
    $region45: #{actor_critic_forward.1} parent=1 // pred_fallthru
      _
    %2806 = vsyncpa [#allocation3], 1
    %2807 = vsyncpa [#allocation5], 1

</llo_original>
